<compile_context>
chip_gen: v6e
topology: v6e:2x2x1
jax: 0.10.0
libtpu: 0.0.40
codegen_flags: <defaults>
</compile_context>

<pallas_src>
import jax
import jax.numpy as jnp
from jax import lax
from jax.experimental import pallas as pl
from jax.experimental.pallas import tpu as pltpu
import numpy as np


def rnn_fused_kernel(tok_ref, emb_ref, wih_ref, whh_ref, b_ref, wfc_ref, bfc_ref,
                     out_ref, xw_ref, xp_ref, hs_ref):
    """Whole forward: embedding gather -> input proj -> recurrence -> FC.

    tok_ref : SMEM (T*B,) int32, time-major flattened token ids (scalar prefetch)
    emb_ref : VMEM (V, H) f32 embedding table
    wih_ref : VMEM (H, H) bf16  == weight_ih_l0.T
    whh_ref : VMEM (H, H) bf16  == weight_hh_l0.T
    b_ref   : VMEM (1, H) f32   == b_ih + b_hh
    wfc_ref : VMEM (H, C) bf16  == fc.weight.T
    bfc_ref : VMEM (1, C) f32
    out_ref : VMEM (B, T, C) f32  (batch-first, matching the PyTorch module)
    xw_ref  : VMEM (T*B, H) f32 scratch: gathered embeddings (time-major)
    xp_ref  : VMEM (T, B, H) f32 scratch: hoisted input projection
    hs_ref  : VMEM (B, T, H) f32 scratch: hidden states (batch-major for the FC)
    """
    T, B, H = xp_ref.shape
    TB = T * B
    C = out_ref.shape[2]

    # (1) Embedding gather: token ids live in SMEM, table rows in VMEM.
    for n in range(TB):                               # T*B tiny; static unroll
        xw_ref[n, :] = emb_ref[tok_ref[n], :]

    # (2) Hoisted input projection: one (T*B,H)@(H,H) bf16 MXU matmul, f32 accum,
    #     parked in VMEM scratch so only one timestep is live in vregs per step.
    xp = (jnp.dot(xw_ref[...].astype(jnp.bfloat16), wih_ref[...],
                  preferred_element_type=jnp.float32)
          + b_ref[...])                               # (1,H) broadcast, f32
    xp_ref[...] = xp.reshape(T, B, H)

    # (3) Recurrence: only tanh(xp[t] + h @ W_hh^T) on the serial critical path.
    #     bf16 matmul operands (halves per-step weight-load bytes), f32 tanh/adds.
    whh = whh_ref[...]                                # 8 vregs (bf16 128x128)
    h = jnp.zeros((B, H), jnp.float32)                # h0 = zeros (matches torch)
    for t in range(T):                                # small static T -> unrolled
        h = jnp.tanh(xp_ref[t]
                     + jnp.dot(h.astype(jnp.bfloat16), whh,
                               preferred_element_type=jnp.float32))
        # Store batch-major so the FC output is already (B, T, C): folds the
        # old wrapper transpose into cheap per-step strided stores.
        hs_ref[:, pl.ds(t, 1), :] = h.reshape(B, 1, H)

    # (4) FC hoisted over all timesteps: one (B*T,H)@(H,C) bf16 MXU matmul and a
    #     single lane-dense (B,T,C) store (C=128 -> unmasked vst).
    out = (jnp.dot(hs_ref[...].reshape(TB, H).astype(jnp.bfloat16), wfc_ref[...],
                   preferred_element_type=jnp.float32)
           + bfc_ref[...])                            # (1,C) broadcast
    out_ref[...] = out.reshape(B, T, C)


def rnn_model_forward(tokens, params):
    """tokens: int32 (B, T).  Returns (B, T, num_classes) float32, batch_first."""
    emb = params["embedding"]          # (V, H) f32
    wih = params["w_ih_t"]             # (H, H) bf16
    whh = params["w_hh_t"]             # (H, H) bf16
    b_rnn = params["b_rnn"]            # (1, H) f32
    wfc = params["w_fc_t"]             # (H, C) bf16
    b_fc = params["b_fc"]              # (1, C) f32

    B, T = tokens.shape
    V, H = emb.shape
    C = wfc.shape[1]

    # Only glue left outside the kernel: flatten token ids time-major (tiny int op).
    tok_flat = jnp.transpose(tokens).reshape(T * B).astype(jnp.int32)

    out = pl.pallas_call(
        rnn_fused_kernel,
        out_shape=jax.ShapeDtypeStruct((B, T, C), jnp.float32),
        grid_spec=pltpu.PrefetchScalarGridSpec(
            num_scalar_prefetch=1,                    # token ids -> SMEM
            grid=(1,),                                # single invocation
            in_specs=[
                pl.BlockSpec((V, H), lambda i, tok: (0, 0)),   # embedding table
                pl.BlockSpec((H, H), lambda i, tok: (0, 0)),   # W_ih^T (bf16)
                pl.BlockSpec((H, H), lambda i, tok: (0, 0)),   # W_hh^T (bf16)
                pl.BlockSpec((1, H), lambda i, tok: (0, 0)),   # b_ih + b_hh
                pl.BlockSpec((H, C), lambda i, tok: (0, 0)),   # W_fc^T (bf16)
                pl.BlockSpec((1, C), lambda i, tok: (0, 0)),   # b_fc
            ],
            out_specs=pl.BlockSpec((B, T, C), lambda i, tok: (0, 0, 0)),
            scratch_shapes=[
                pltpu.VMEM((T * B, H), jnp.float32),  # gathered embeddings
                pltpu.VMEM((T, B, H), jnp.float32),   # hoisted input projection
                pltpu.VMEM((B, T, H), jnp.float32),   # hidden states (batch-major)
            ],
        ),
        compiler_params=pltpu.CompilerParams(
            dimension_semantics=("arbitrary",),
            vmem_limit_bytes=32 * 1024 * 1024,        # headroom vs v5e 16MiB default
        ),
    )(tok_flat, emb, wih, whh, b_rnn, wfc, b_fc)

    return out                                        # already (B, T, C)


def rnn_model_reference(tokens, params):
    """Pure-JAX reference with the SAME bf16-matmul / f32-accum precision policy."""
    x = jnp.take(params["embedding"], tokens, axis=0)             # (B, T, H) f32
    B, T, H = x.shape
    xp = (jnp.dot(x.astype(jnp.bfloat16), params["w_ih_t"],
                  preferred_element_type=jnp.float32)
          + params["b_rnn"][0])                                   # (B, T, H) f32

    def step(h, xp_t):
        h_new = jnp.tanh(xp_t + jnp.dot(h.astype(jnp.bfloat16), params["w_hh_t"],
                                        preferred_element_type=jnp.float32))
        return h_new, h_new

    h0 = jnp.zeros((B, H), jnp.float32)
    _, hs = lax.scan(step, h0, jnp.transpose(xp, (1, 0, 2)))      # (T, B, H)
    hs = jnp.transpose(hs, (1, 0, 2))                             # (B, T, H)
    out = (jnp.dot(hs.astype(jnp.bfloat16), params["w_fc_t"],
                   preferred_element_type=jnp.float32)
           + params["b_fc"][0])                                   # (B, T, C)
    return out


def init_params(key, vocab, hidden, num_classes):
    ks = jax.random.split(key, 7)
    scale = 1.0 / np.sqrt(hidden)
    emb = jax.random.normal(ks[0], (vocab, hidden), jnp.float32)
    w_ih = jax.random.uniform(ks[1], (hidden, hidden), jnp.float32, -scale, scale)
    w_hh = jax.random.uniform(ks[2], (hidden, hidden), jnp.float32, -scale, scale)
    b_ih = jax.random.uniform(ks[3], (hidden,), jnp.float32, -scale, scale)
    b_hh = jax.random.uniform(ks[4], (hidden,), jnp.float32, -scale, scale)
    w_fc = jax.random.uniform(ks[5], (num_classes, hidden), jnp.float32, -scale, scale)
    b_fc = jax.random.uniform(ks[6], (num_classes,), jnp.float32, -scale, scale)
    return {
        "embedding": emb,                              # gathered in f32, cast at matmul
        "w_ih_t": w_ih.T.astype(jnp.bfloat16),         # used as x @ W_ih^T
        "w_hh_t": w_hh.T.astype(jnp.bfloat16),         # used as h @ W_hh^T
        "b_rnn": (b_ih + b_hh)[None, :],               # (1, H) f32
        "w_fc_t": w_fc.T.astype(jnp.bfloat16),         # (H, C)
        "b_fc": b_fc[None, :],                         # (1, C) f32
    }


if __name__ == "__main__":
    # Small shapes consistent with the module: vocab == num_classes == input_size.
    B, T = 8, 8
    hidden_size = 128
    vocab = 128          # input_size
    num_classes = vocab

    key = jax.random.PRNGKey(0)
    k_tok, k_par = jax.random.split(key)
    tokens = jax.random.randint(k_tok, (B, T), 0, vocab, dtype=jnp.int32)
    params = init_params(k_par, vocab, hidden_size, num_classes)

    out = jax.block_until_ready(rnn_model_forward(tokens, params))
    ref = jax.block_until_ready(rnn_model_reference(tokens, params))

    assert out.shape == (B, T, num_classes)
    # Kernel and reference share the same bf16-operand / f32-accumulation policy;
    # remaining deltas are only accumulation-order differences.
    np.testing.assert_allclose(np.asarray(out), np.asarray(ref),
                               rtol=1e-2, atol=1e-2)
    print("KERNEL_OK")
</pallas_src>

<mosaic_0001>
module attributes {stable_mosaic.version = 11 : i64} {
  func.func @rnn_fused_kernel(%arg0: i32, %arg1: memref<64xi32, #tpu.memory_space<smem>>, %arg2: memref<128x128xf32, #tpu.memory_space<vmem>>, %arg3: memref<128x128xbf16, #tpu.memory_space<vmem>>, %arg4: memref<128x128xbf16, #tpu.memory_space<vmem>>, %arg5: memref<1x128xf32, #tpu.memory_space<vmem>>, %arg6: memref<128x128xbf16, #tpu.memory_space<vmem>>, %arg7: memref<1x128xf32, #tpu.memory_space<vmem>>, %arg8: memref<8x8x128xf32, #tpu.memory_space<vmem>>, %arg9: memref<64x128xf32, #tpu.memory_space<vmem>>, %arg10: memref<8x8x128xf32, #tpu.memory_space<vmem>>, %arg11: memref<8x8x128xf32, #tpu.memory_space<vmem>>) attributes {dimension_semantics = [#tpu.dimension_semantics<arbitrary>], iteration_bounds = array<i64: 1>, scalar_prefetch = 1 : i64, scratch_operands = 3 : i64, tpu.core_type = #tpu.core_type<tc>, window_params = [{pipeline_mode = #tpu.pipeline_mode<synchronous>, transform_indices = @transform_0, window_bounds = array<i64: 128, 128>}, {pipeline_mode = #tpu.pipeline_mode<synchronous>, transform_indices = @transform_1, window_bounds = array<i64: 128, 128>}, {pipeline_mode = #tpu.pipeline_mode<synchronous>, transform_indices = @transform_2, window_bounds = array<i64: 128, 128>}, {pipeline_mode = #tpu.pipeline_mode<synchronous>, transform_indices = @transform_3, window_bounds = array<i64: 1, 128>}, {pipeline_mode = #tpu.pipeline_mode<synchronous>, transform_indices = @transform_4, window_bounds = array<i64: 128, 128>}, {pipeline_mode = #tpu.pipeline_mode<synchronous>, transform_indices = @transform_5, window_bounds = array<i64: 1, 128>}, {pipeline_mode = #tpu.pipeline_mode<synchronous>, transform_indices = @transform_6, window_bounds = array<i64: 8, 8, 128>}]} {
    %c0 = arith.constant 0 : index
    %0 = memref.load %arg1[%c0] : memref<64xi32, #tpu.memory_space<smem>>
    %1 = arith.index_cast %0 : i32 to index
    %c0_0 = arith.constant 0 : index
    %2 = vector.load %arg2[%1, %c0_0] : memref<128x128xf32, #tpu.memory_space<vmem>>, vector<1x128xf32>
    %3 = vector.shape_cast %2 : vector<1x128xf32> to vector<128xf32>
    %c0_1 = arith.constant 0 : index
    %c0_2 = arith.constant 0 : index
    %4 = vector.load %arg9[%c0_1, %c0_2] : memref<64x128xf32, #tpu.memory_space<vmem>>, vector<1x128xf32>
    %5 = vector.shape_cast %4 : vector<1x128xf32> to vector<128xf32>
    %6 = vector.shape_cast %3 : vector<128xf32> to vector<1x128xf32>
    tpu.vector_store %arg9[%c0_1, %c0_2], %6 {strides = array<i32>} : memref<64x128xf32, #tpu.memory_space<vmem>>, vector<1x128xf32>,
    %c1 = arith.constant 1 : index
    %7 = memref.load %arg1[%c1] : memref<64xi32, #tpu.memory_space<smem>>
    %8 = arith.index_cast %7 : i32 to index
    %c0_3 = arith.constant 0 : index
    %9 = vector.load %arg2[%8, %c0_3] : memref<128x128xf32, #tpu.memory_space<vmem>>, vector<1x128xf32>
    %10 = vector.shape_cast %9 : vector<1x128xf32> to vector<128xf32>
    %c1_4 = arith.constant 1 : index
    %c0_5 = arith.constant 0 : index
    %11 = vector.load %arg9[%c1_4, %c0_5] : memref<64x128xf32, #tpu.memory_space<vmem>>, vector<1x128xf32>
    %12 = vector.shape_cast %11 : vector<1x128xf32> to vector<128xf32>
    %13 = vector.shape_cast %10 : vector<128xf32> to vector<1x128xf32>
    tpu.vector_store %arg9[%c1_4, %c0_5], %13 {strides = array<i32>} : memref<64x128xf32, #tpu.memory_space<vmem>>, vector<1x128xf32>,
    %c2 = arith.constant 2 : index
    %14 = memref.load %arg1[%c2] : memref<64xi32, #tpu.memory_space<smem>>
    %15 = arith.index_cast %14 : i32 to index
    %c0_6 = arith.constant 0 : index
    %16 = vector.load %arg2[%15, %c0_6] : memref<128x128xf32, #tpu.memory_space<vmem>>, vector<1x128xf32>
    %17 = vector.shape_cast %16 : vector<1x128xf32> to vector<128xf32>
    %c2_7 = arith.constant 2 : index
    %c0_8 = arith.constant 0 : index
    %18 = vector.load %arg9[%c2_7, %c0_8] : memref<64x128xf32, #tpu.memory_space<vmem>>, vector<1x128xf32>
    %19 = vector.shape_cast %18 : vector<1x128xf32> to vector<128xf32>
    %20 = vector.shape_cast %17 : vector<128xf32> to vector<1x128xf32>
    tpu.vector_store %arg9[%c2_7, %c0_8], %20 {strides = array<i32>} : memref<64x128xf32, #tpu.memory_space<vmem>>, vector<1x128xf32>,
    %c3 = arith.constant 3 : index
    %21 = memref.load %arg1[%c3] : memref<64xi32, #tpu.memory_space<smem>>
    %22 = arith.index_cast %21 : i32 to index
    %c0_9 = arith.constant 0 : index
    %23 = vector.load %arg2[%22, %c0_9] : memref<128x128xf32, #tpu.memory_space<vmem>>, vector<1x128xf32>
    %24 = vector.shape_cast %23 : vector<1x128xf32> to vector<128xf32>
    %c3_10 = arith.constant 3 : index
    %c0_11 = arith.constant 0 : index
    %25 = vector.load %arg9[%c3_10, %c0_11] : memref<64x128xf32, #tpu.memory_space<vmem>>, vector<1x128xf32>
    %26 = vector.shape_cast %25 : vector<1x128xf32> to vector<128xf32>
    %27 = vector.shape_cast %24 : vector<128xf32> to vector<1x128xf32>
    tpu.vector_store %arg9[%c3_10, %c0_11], %27 {strides = array<i32>} : memref<64x128xf32, #tpu.memory_space<vmem>>, vector<1x128xf32>,
    %c4 = arith.constant 4 : index
    %28 = memref.load %arg1[%c4] : memref<64xi32, #tpu.memory_space<smem>>
    %29 = arith.index_cast %28 : i32 to index
    %c0_12 = arith.constant 0 : index
    %30 = vector.load %arg2[%29, %c0_12] : memref<128x128xf32, #tpu.memory_space<vmem>>, vector<1x128xf32>
    %31 = vector.shape_cast %30 : vector<1x128xf32> to vector<128xf32>
    %c4_13 = arith.constant 4 : index
    %c0_14 = arith.constant 0 : index
    %32 = vector.load %arg9[%c4_13, %c0_14] : memref<64x128xf32, #tpu.memory_space<vmem>>, vector<1x128xf32>
    %33 = vector.shape_cast %32 : vector<1x128xf32> to vector<128xf32>
    %34 = vector.shape_cast %31 : vector<128xf32> to vector<1x128xf32>
    tpu.vector_store %arg9[%c4_13, %c0_14], %34 {strides = array<i32>} : memref<64x128xf32, #tpu.memory_space<vmem>>, vector<1x128xf32>,
    %c5 = arith.constant 5 : index
    %35 = memref.load %arg1[%c5] : memref<64xi32, #tpu.memory_space<smem>>
    %36 = arith.index_cast %35 : i32 to index
    %c0_15 = arith.constant 0 : index
    %37 = vector.load %arg2[%36, %c0_15] : memref<128x128xf32, #tpu.memory_space<vmem>>, vector<1x128xf32>
    %38 = vector.shape_cast %37 : vector<1x128xf32> to vector<128xf32>
    %c5_16 = arith.constant 5 : index
    %c0_17 = arith.constant 0 : index
    %39 = vector.load %arg9[%c5_16, %c0_17] : memref<64x128xf32, #tpu.memory_space<vmem>>, vector<1x128xf32>
    %40 = vector.shape_cast %39 : vector<1x128xf32> to vector<128xf32>
    %41 = vector.shape_cast %38 : vector<128xf32> to vector<1x128xf32>
    tpu.vector_store %arg9[%c5_16, %c0_17], %41 {strides = array<i32>} : memref<64x128xf32, #tpu.memory_space<vmem>>, vector<1x128xf32>,
    %c6 = arith.constant 6 : index
    %42 = memref.load %arg1[%c6] : memref<64xi32, #tpu.memory_space<smem>>
    %43 = arith.index_cast %42 : i32 to index
    %c0_18 = arith.constant 0 : index
    %44 = vector.load %arg2[%43, %c0_18] : memref<128x128xf32, #tpu.memory_space<vmem>>, vector<1x128xf32>
    %45 = vector.shape_cast %44 : vector<1x128xf32> to vector<128xf32>
    %c6_19 = arith.constant 6 : index
    %c0_20 = arith.constant 0 : index
    %46 = vector.load %arg9[%c6_19, %c0_20] : memref<64x128xf32, #tpu.memory_space<vmem>>, vector<1x128xf32>
    %47 = vector.shape_cast %46 : vector<1x128xf32> to vector<128xf32>
    %48 = vector.shape_cast %45 : vector<128xf32> to vector<1x128xf32>
    tpu.vector_store %arg9[%c6_19, %c0_20], %48 {strides = array<i32>} : memref<64x128xf32, #tpu.memory_space<vmem>>, vector<1x128xf32>,
    %c7 = arith.constant 7 : index
    %49 = memref.load %arg1[%c7] : memref<64xi32, #tpu.memory_space<smem>>
    %50 = arith.index_cast %49 : i32 to index
    %c0_21 = arith.constant 0 : index
    %51 = vector.load %arg2[%50, %c0_21] : memref<128x128xf32, #tpu.memory_space<vmem>>, vector<1x128xf32>
    %52 = vector.shape_cast %51 : vector<1x128xf32> to vector<128xf32>
    %c7_22 = arith.constant 7 : index
    %c0_23 = arith.constant 0 : index
    %53 = vector.load %arg9[%c7_22, %c0_23] : memref<64x128xf32, #tpu.memory_space<vmem>>, vector<1x128xf32>
    %54 = vector.shape_cast %53 : vector<1x128xf32> to vector<128xf32>
    %55 = vector.shape_cast %52 : vector<128xf32> to vector<1x128xf32>
    tpu.vector_store %arg9[%c7_22, %c0_23], %55 {strides = array<i32>} : memref<64x128xf32, #tpu.memory_space<vmem>>, vector<1x128xf32>,
    %c8 = arith.constant 8 : index
    %56 = memref.load %arg1[%c8] : memref<64xi32, #tpu.memory_space<smem>>
    %57 = arith.index_cast %56 : i32 to index
    %c0_24 = arith.constant 0 : index
    %58 = vector.load %arg2[%57, %c0_24] : memref<128x128xf32, #tpu.memory_space<vmem>>, vector<1x128xf32>
    %59 = vector.shape_cast %58 : vector<1x128xf32> to vector<128xf32>
    %c8_25 = arith.constant 8 : index
    %c0_26 = arith.constant 0 : index
    %60 = vector.load %arg9[%c8_25, %c0_26] : memref<64x128xf32, #tpu.memory_space<vmem>>, vector<1x128xf32>
    %61 = vector.shape_cast %60 : vector<1x128xf32> to vector<128xf32>
    %62 = vector.shape_cast %59 : vector<128xf32> to vector<1x128xf32>
    tpu.vector_store %arg9[%c8_25, %c0_26], %62 {strides = array<i32>} : memref<64x128xf32, #tpu.memory_space<vmem>>, vector<1x128xf32>,
    %c9 = arith.constant 9 : index
    %63 = memref.load %arg1[%c9] : memref<64xi32, #tpu.memory_space<smem>>
    %64 = arith.index_cast %63 : i32 to index
    %c0_27 = arith.constant 0 : index
    %65 = vector.load %arg2[%64, %c0_27] : memref<128x128xf32, #tpu.memory_space<vmem>>, vector<1x128xf32>
    %66 = vector.shape_cast %65 : vector<1x128xf32> to vector<128xf32>
    %c9_28 = arith.constant 9 : index
    %c0_29 = arith.constant 0 : index
    %67 = vector.load %arg9[%c9_28, %c0_29] : memref<64x128xf32, #tpu.memory_space<vmem>>, vector<1x128xf32>
    %68 = vector.shape_cast %67 : vector<1x128xf32> to vector<128xf32>
    %69 = vector.shape_cast %66 : vector<128xf32> to vector<1x128xf32>
    tpu.vector_store %arg9[%c9_28, %c0_29], %69 {strides = array<i32>} : memref<64x128xf32, #tpu.memory_space<vmem>>, vector<1x128xf32>,
    %c10 = arith.constant 10 : index
    %70 = memref.load %arg1[%c10] : memref<64xi32, #tpu.memory_space<smem>>
    %71 = arith.index_cast %70 : i32 to index
    %c0_30 = arith.constant 0 : index
    %72 = vector.load %arg2[%71, %c0_30] : memref<128x128xf32, #tpu.memory_space<vmem>>, vector<1x128xf32>
    %73 = vector.shape_cast %72 : vector<1x128xf32> to vector<128xf32>
    %c10_31 = arith.constant 10 : index
    %c0_32 = arith.constant 0 : index
    %74 = vector.load %arg9[%c10_31, %c0_32] : memref<64x128xf32, #tpu.memory_space<vmem>>, vector<1x128xf32>
    %75 = vector.shape_cast %74 : vector<1x128xf32> to vector<128xf32>
    %76 = vector.shape_cast %73 : vector<128xf32> to vector<1x128xf32>
    tpu.vector_store %arg9[%c10_31, %c0_32], %76 {strides = array<i32>} : memref<64x128xf32, #tpu.memory_space<vmem>>, vector<1x128xf32>,
    %c11 = arith.constant 11 : index
    %77 = memref.load %arg1[%c11] : memref<64xi32, #tpu.memory_space<smem>>
    %78 = arith.index_cast %77 : i32 to index
    %c0_33 = arith.constant 0 : index
    %79 = vector.load %arg2[%78, %c0_33] : memref<128x128xf32, #tpu.memory_space<vmem>>, vector<1x128xf32>
    %80 = vector.shape_cast %79 : vector<1x128xf32> to vector<128xf32>
    %c11_34 = arith.constant 11 : index
    %c0_35 = arith.constant 0 : index
    %81 = vector.load %arg9[%c11_34, %c0_35] : memref<64x128xf32, #tpu.memory_space<vmem>>, vector<1x128xf32>
    %82 = vector.shape_cast %81 : vector<1x128xf32> to vector<128xf32>
    %83 = vector.shape_cast %80 : vector<128xf32> to vector<1x128xf32>
    tpu.vector_store %arg9[%c11_34, %c0_35], %83 {strides = array<i32>} : memref<64x128xf32, #tpu.memory_space<vmem>>, vector<1x128xf32>,
    %c12 = arith.constant 12 : index
    %84 = memref.load %arg1[%c12] : memref<64xi32, #tpu.memory_space<smem>>
    %85 = arith.index_cast %84 : i32 to index
    %c0_36 = arith.constant 0 : index
    %86 = vector.load %arg2[%85, %c0_36] : memref<128x128xf32, #tpu.memory_space<vmem>>, vector<1x128xf32>
    %87 = vector.shape_cast %86 : vector<1x128xf32> to vector<128xf32>
    %c12_37 = arith.constant 12 : index
    %c0_38 = arith.constant 0 : index
    %88 = vector.load %arg9[%c12_37, %c0_38] : memref<64x128xf32, #tpu.memory_space<vmem>>, vector<1x128xf32>
    %89 = vector.shape_cast %88 : vector<1x128xf32> to vector<128xf32>
    %90 = vector.shape_cast %87 : vector<128xf32> to vector<1x128xf32>
    tpu.vector_store %arg9[%c12_37, %c0_38], %90 {strides = array<i32>} : memref<64x128xf32, #tpu.memory_space<vmem>>, vector<1x128xf32>,
    %c13 = arith.constant 13 : index
    %91 = memref.load %arg1[%c13] : memref<64xi32, #tpu.memory_space<smem>>
    %92 = arith.index_cast %91 : i32 to index
    %c0_39 = arith.constant 0 : index
    %93 = vector.load %arg2[%92, %c0_39] : memref<128x128xf32, #tpu.memory_space<vmem>>, vector<1x128xf32>
    %94 = vector.shape_cast %93 : vector<1x128xf32> to vector<128xf32>
    %c13_40 = arith.constant 13 : index
    %c0_41 = arith.constant 0 : index
    %95 = vector.load %arg9[%c13_40, %c0_41] : memref<64x128xf32, #tpu.memory_space<vmem>>, vector<1x128xf32>
    %96 = vector.shape_cast %95 : vector<1x128xf32> to vector<128xf32>
    %97 = vector.shape_cast %94 : vector<128xf32> to vector<1x128xf32>
    tpu.vector_store %arg9[%c13_40, %c0_41], %97 {strides = array<i32>} : memref<64x128xf32, #tpu.memory_space<vmem>>, vector<1x128xf32>,
    %c14 = arith.constant 14 : index
    %98 = memref.load %arg1[%c14] : memref<64xi32, #tpu.memory_space<smem>>
    %99 = arith.index_cast %98 : i32 to index
    %c0_42 = arith.constant 0 : index
    %100 = vector.load %arg2[%99, %c0_42] : memref<128x128xf32, #tpu.memory_space<vmem>>, vector<1x128xf32>
    %101 = vector.shape_cast %100 : vector<1x128xf32> to vector<128xf32>
    %c14_43 = arith.constant 14 : index
    %c0_44 = arith.constant 0 : index
    %102 = vector.load %arg9[%c14_43, %c0_44] : memref<64x128xf32, #tpu.memory_space<vmem>>, vector<1x128xf32>
    %103 = vector.shape_cast %102 : vector<1x128xf32> to vector<128xf32>
    %104 = vector.shape_cast %101 : vector<128xf32> to vector<1x128xf32>
    tpu.vector_store %arg9[%c14_43, %c0_44], %104 {strides = array<i32>} : memref<64x128xf32, #tpu.memory_space<vmem>>, vector<1x128xf32>,
    %c15 = arith.constant 15 : index
    %105 = memref.load %arg1[%c15] : memref<64xi32, #tpu.memory_space<smem>>
    %106 = arith.index_cast %105 : i32 to index
    %c0_45 = arith.constant 0 : index
    %107 = vector.load %arg2[%106, %c0_45] : memref<128x128xf32, #tpu.memory_space<vmem>>, vector<1x128xf32>
    %108 = vector.shape_cast %107 : vector<1x128xf32> to vector<128xf32>
    %c15_46 = arith.constant 15 : index
    %c0_47 = arith.constant 0 : index
    %109 = vector.load %arg9[%c15_46, %c0_47] : memref<64x128xf32, #tpu.memory_space<vmem>>, vector<1x128xf32>
    %110 = vector.shape_cast %109 : vector<1x128xf32> to vector<128xf32>
    %111 = vector.shape_cast %108 : vector<128xf32> to vector<1x128xf32>
    tpu.vector_store %arg9[%c15_46, %c0_47], %111 {strides = array<i32>} : memref<64x128xf32, #tpu.memory_space<vmem>>, vector<1x128xf32>,
    %c16 = arith.constant 16 : index
    %112 = memref.load %arg1[%c16] : memref<64xi32, #tpu.memory_space<smem>>
    %113 = arith.index_cast %112 : i32 to index
    %c0_48 = arith.constant 0 : index
    %114 = vector.load %arg2[%113, %c0_48] : memref<128x128xf32, #tpu.memory_space<vmem>>, vector<1x128xf32>
    %115 = vector.shape_cast %114 : vector<1x128xf32> to vector<128xf32>
    %c16_49 = arith.constant 16 : index
    %c0_50 = arith.constant 0 : index
    %116 = vector.load %arg9[%c16_49, %c0_50] : memref<64x128xf32, #tpu.memory_space<vmem>>, vector<1x128xf32>
    %117 = vector.shape_cast %116 : vector<1x128xf32> to vector<128xf32>
    %118 = vector.shape_cast %115 : vector<128xf32> to vector<1x128xf32>
    tpu.vector_store %arg9[%c16_49, %c0_50], %118 {strides = array<i32>} : memref<64x128xf32, #tpu.memory_space<vmem>>, vector<1x128xf32>,
    %c17 = arith.constant 17 : index
    %119 = memref.load %arg1[%c17] : memref<64xi32, #tpu.memory_space<smem>>
    %120 = arith.index_cast %119 : i32 to index
    %c0_51 = arith.constant 0 : index
    %121 = vector.load %arg2[%120, %c0_51] : memref<128x128xf32, #tpu.memory_space<vmem>>, vector<1x128xf32>
    %122 = vector.shape_cast %121 : vector<1x128xf32> to vector<128xf32>
    %c17_52 = arith.constant 17 : index
    %c0_53 = arith.constant 0 : index
    %123 = vector.load %arg9[%c17_52, %c0_53] : memref<64x128xf32, #tpu.memory_space<vmem>>, vector<1x128xf32>
    %124 = vector.shape_cast %123 : vector<1x128xf32> to vector<128xf32>
    %125 = vector.shape_cast %122 : vector<128xf32> to vector<1x128xf32>
    tpu.vector_store %arg9[%c17_52, %c0_53], %125 {strides = array<i32>} : memref<64x128xf32, #tpu.memory_space<vmem>>, vector<1x128xf32>,
    %c18 = arith.constant 18 : index
    %126 = memref.load %arg1[%c18] : memref<64xi32, #tpu.memory_space<smem>>
    %127 = arith.index_cast %126 : i32 to index
    %c0_54 = arith.constant 0 : index
    %128 = vector.load %arg2[%127, %c0_54] : memref<128x128xf32, #tpu.memory_space<vmem>>, vector<1x128xf32>
    %129 = vector.shape_cast %128 : vector<1x128xf32> to vector<128xf32>
    %c18_55 = arith.constant 18 : index
    %c0_56 = arith.constant 0 : index
    %130 = vector.load %arg9[%c18_55, %c0_56] : memref<64x128xf32, #tpu.memory_space<vmem>>, vector<1x128xf32>
    %131 = vector.shape_cast %130 : vector<1x128xf32> to vector<128xf32>
    %132 = vector.shape_cast %129 : vector<128xf32> to vector<1x128xf32>
    tpu.vector_store %arg9[%c18_55, %c0_56], %132 {strides = array<i32>} : memref<64x128xf32, #tpu.memory_space<vmem>>, vector<1x128xf32>,
    %c19 = arith.constant 19 : index
    %133 = memref.load %arg1[%c19] : memref<64xi32, #tpu.memory_space<smem>>
    %134 = arith.index_cast %133 : i32 to index
    %c0_57 = arith.constant 0 : index
    %135 = vector.load %arg2[%134, %c0_57] : memref<128x128xf32, #tpu.memory_space<vmem>>, vector<1x128xf32>
    %136 = vector.shape_cast %135 : vector<1x128xf32> to vector<128xf32>
    %c19_58 = arith.constant 19 : index
    %c0_59 = arith.constant 0 : index
    %137 = vector.load %arg9[%c19_58, %c0_59] : memref<64x128xf32, #tpu.memory_space<vmem>>, vector<1x128xf32>
    %138 = vector.shape_cast %137 : vector<1x128xf32> to vector<128xf32>
    %139 = vector.shape_cast %136 : vector<128xf32> to vector<1x128xf32>
    tpu.vector_store %arg9[%c19_58, %c0_59], %139 {strides = array<i32>} : memref<64x128xf32, #tpu.memory_space<vmem>>, vector<1x128xf32>,
    %c20 = arith.constant 20 : index
    %140 = memref.load %arg1[%c20] : memref<64xi32, #tpu.memory_space<smem>>
    %141 = arith.index_cast %140 : i32 to index
    %c0_60 = arith.constant 0 : index
    %142 = vector.load %arg2[%141, %c0_60] : memref<128x128xf32, #tpu.memory_space<vmem>>, vector<1x128xf32>
    %143 = vector.shape_cast %142 : vector<1x128xf32> to vector<128xf32>
    %c20_61 = arith.constant 20 : index
    %c0_62 = arith.constant 0 : index
    %144 = vector.load %arg9[%c20_61, %c0_62] : memref<64x128xf32, #tpu.memory_space<vmem>>, vector<1x128xf32>
    %145 = vector.shape_cast %144 : vector<1x128xf32> to vector<128xf32>
    %146 = vector.shape_cast %143 : vector<128xf32> to vector<1x128xf32>
    tpu.vector_store %arg9[%c20_61, %c0_62], %146 {strides = array<i32>} : memref<64x128xf32, #tpu.memory_space<vmem>>, vector<1x128xf32>,
    %c21 = arith.constant 21 : index
    %147 = memref.load %arg1[%c21] : memref<64xi32, #tpu.memory_space<smem>>
    %148 = arith.index_cast %147 : i32 to index
    %c0_63 = arith.constant 0 : index
    %149 = vector.load %arg2[%148, %c0_63] : memref<128x128xf32, #tpu.memory_space<vmem>>, vector<1x128xf32>
    %150 = vector.shape_cast %149 : vector<1x128xf32> to vector<128xf32>
    %c21_64 = arith.constant 21 : index
    %c0_65 = arith.constant 0 : index
    %151 = vector.load %arg9[%c21_64, %c0_65] : memref<64x128xf32, #tpu.memory_space<vmem>>, vector<1x128xf32>
    %152 = vector.shape_cast %151 : vector<1x128xf32> to vector<128xf32>
    %153 = vector.shape_cast %150 : vector<128xf32> to vector<1x128xf32>
    tpu.vector_store %arg9[%c21_64, %c0_65], %153 {strides = array<i32>} : memref<64x128xf32, #tpu.memory_space<vmem>>, vector<1x128xf32>,
    %c22 = arith.constant 22 : index
    %154 = memref.load %arg1[%c22] : memref<64xi32, #tpu.memory_space<smem>>
    %155 = arith.index_cast %154 : i32 to index
    %c0_66 = arith.constant 0 : index
    %156 = vector.load %arg2[%155, %c0_66] : memref<128x128xf32, #tpu.memory_space<vmem>>, vector<1x128xf32>
    %157 = vector.shape_cast %156 : vector<1x128xf32> to vector<128xf32>
    %c22_67 = arith.constant 22 : index
    %c0_68 = arith.constant 0 : index
    %158 = vector.load %arg9[%c22_67, %c0_68] : memref<64x128xf32, #tpu.memory_space<vmem>>, vector<1x128xf32>
    %159 = vector.shape_cast %158 : vector<1x128xf32> to vector<128xf32>
    %160 = vector.shape_cast %157 : vector<128xf32> to vector<1x128xf32>
    tpu.vector_store %arg9[%c22_67, %c0_68], %160 {strides = array<i32>} : memref<64x128xf32, #tpu.memory_space<vmem>>, vector<1x128xf32>,
    %c23 = arith.constant 23 : index
    %161 = memref.load %arg1[%c23] : memref<64xi32, #tpu.memory_space<smem>>
    %162 = arith.index_cast %161 : i32 to index
    %c0_69 = arith.constant 0 : index
    %163 = vector.load %arg2[%162, %c0_69] : memref<128x128xf32, #tpu.memory_space<vmem>>, vector<1x128xf32>
    %164 = vector.shape_cast %163 : vector<1x128xf32> to vector<128xf32>
    %c23_70 = arith.constant 23 : index
    %c0_71 = arith.constant 0 : index
    %165 = vector.load %arg9[%c23_70, %c0_71] : memref<64x128xf32, #tpu.memory_space<vmem>>, vector<1x128xf32>
    %166 = vector.shape_cast %165 : vector<1x128xf32> to vector<128xf32>
    %167 = vector.shape_cast %164 : vector<128xf32> to vector<1x128xf32>
    tpu.vector_store %arg9[%c23_70, %c0_71], %167 {strides = array<i32>} : memref<64x128xf32, #tpu.memory_space<vmem>>, vector<1x128xf32>,
    %c24 = arith.constant 24 : index
    %168 = memref.load %arg1[%c24] : memref<64xi32, #tpu.memory_space<smem>>
    %169 = arith.index_cast %168 : i32 to index
    %c0_72 = arith.constant 0 : index
    %170 = vector.load %arg2[%169, %c0_72] : memref<128x128xf32, #tpu.memory_space<vmem>>, vector<1x128xf32>
    %171 = vector.shape_cast %170 : vector<1x128xf32> to vector<128xf32>
    %c24_73 = arith.constant 24 : index
    %c0_74 = arith.constant 0 : index
    %172 = vector.load %arg9[%c24_73, %c0_74] : memref<64x128xf32, #tpu.memory_space<vmem>>, vector<1x128xf32>
    %173 = vector.shape_cast %172 : vector<1x128xf32> to vector<128xf32>
    %174 = vector.shape_cast %171 : vector<128xf32> to vector<1x128xf32>
    tpu.vector_store %arg9[%c24_73, %c0_74], %174 {strides = array<i32>} : memref<64x128xf32, #tpu.memory_space<vmem>>, vector<1x128xf32>,
    %c25 = arith.constant 25 : index
    %175 = memref.load %arg1[%c25] : memref<64xi32, #tpu.memory_space<smem>>
    %176 = arith.index_cast %175 : i32 to index
    %c0_75 = arith.constant 0 : index
    %177 = vector.load %arg2[%176, %c0_75] : memref<128x128xf32, #tpu.memory_space<vmem>>, vector<1x128xf32>
    %178 = vector.shape_cast %177 : vector<1x128xf32> to vector<128xf32>
    %c25_76 = arith.constant 25 : index
    %c0_77 = arith.constant 0 : index
    %179 = vector.load %arg9[%c25_76, %c0_77] : memref<64x128xf32, #tpu.memory_space<vmem>>, vector<1x128xf32>
    %180 = vector.shape_cast %179 : vector<1x128xf32> to vector<128xf32>
    %181 = vector.shape_cast %178 : vector<128xf32> to vector<1x128xf32>
    tpu.vector_store %arg9[%c25_76, %c0_77], %181 {strides = array<i32>} : memref<64x128xf32, #tpu.memory_space<vmem>>, vector<1x128xf32>,
    %c26 = arith.constant 26 : index
    %182 = memref.load %arg1[%c26] : memref<64xi32, #tpu.memory_space<smem>>
    %183 = arith.index_cast %182 : i32 to index
    %c0_78 = arith.constant 0 : index
    %184 = vector.load %arg2[%183, %c0_78] : memref<128x128xf32, #tpu.memory_space<vmem>>, vector<1x128xf32>
    %185 = vector.shape_cast %184 : vector<1x128xf32> to vector<128xf32>
    %c26_79 = arith.constant 26 : index
    %c0_80 = arith.constant 0 : index
    %186 = vector.load %arg9[%c26_79, %c0_80] : memref<64x128xf32, #tpu.memory_space<vmem>>, vector<1x128xf32>
    %187 = vector.shape_cast %186 : vector<1x128xf32> to vector<128xf32>
    %188 = vector.shape_cast %185 : vector<128xf32> to vector<1x128xf32>
    tpu.vector_store %arg9[%c26_79, %c0_80], %188 {strides = array<i32>} : memref<64x128xf32, #tpu.memory_space<vmem>>, vector<1x128xf32>,
    %c27 = arith.constant 27 : index
    %189 = memref.load %arg1[%c27] : memref<64xi32, #tpu.memory_space<smem>>
    %190 = arith.index_cast %189 : i32 to index
    %c0_81 = arith.constant 0 : index
    %191 = vector.load %arg2[%190, %c0_81] : memref<128x128xf32, #tpu.memory_space<vmem>>, vector<1x128xf32>
    %192 = vector.shape_cast %191 : vector<1x128xf32> to vector<128xf32>
    %c27_82 = arith.constant 27 : index
    %c0_83 = arith.constant 0 : index
    %193 = vector.load %arg9[%c27_82, %c0_83] : memref<64x128xf32, #tpu.memory_space<vmem>>, vector<1x128xf32>
    %194 = vector.shape_cast %193 : vector<1x128xf32> to vector<128xf32>
    %195 = vector.shape_cast %192 : vector<128xf32> to vector<1x128xf32>
    tpu.vector_store %arg9[%c27_82, %c0_83], %195 {strides = array<i32>} : memref<64x128xf32, #tpu.memory_space<vmem>>, vector<1x128xf32>,
    %c28 = arith.constant 28 : index
    %196 = memref.load %arg1[%c28] : memref<64xi32, #tpu.memory_space<smem>>
    %197 = arith.index_cast %196 : i32 to index
    %c0_84 = arith.constant 0 : index
    %198 = vector.load %arg2[%197, %c0_84] : memref<128x128xf32, #tpu.memory_space<vmem>>, vector<1x128xf32>
    %199 = vector.shape_cast %198 : vector<1x128xf32> to vector<128xf32>
    %c28_85 = arith.constant 28 : index
    %c0_86 = arith.constant 0 : index
    %200 = vector.load %arg9[%c28_85, %c0_86] : memref<64x128xf32, #tpu.memory_space<vmem>>, vector<1x128xf32>
    %201 = vector.shape_cast %200 : vector<1x128xf32> to vector<128xf32>
    %202 = vector.shape_cast %199 : vector<128xf32> to vector<1x128xf32>
    tpu.vector_store %arg9[%c28_85, %c0_86], %202 {strides = array<i32>} : memref<64x128xf32, #tpu.memory_space<vmem>>, vector<1x128xf32>,
    %c29 = arith.constant 29 : index
    %203 = memref.load %arg1[%c29] : memref<64xi32, #tpu.memory_space<smem>>
    %204 = arith.index_cast %203 : i32 to index
    %c0_87 = arith.constant 0 : index
    %205 = vector.load %arg2[%204, %c0_87] : memref<128x128xf32, #tpu.memory_space<vmem>>, vector<1x128xf32>
    %206 = vector.shape_cast %205 : vector<1x128xf32> to vector<128xf32>
    %c29_88 = arith.constant 29 : index
    %c0_89 = arith.constant 0 : index
    %207 = vector.load %arg9[%c29_88, %c0_89] : memref<64x128xf32, #tpu.memory_space<vmem>>, vector<1x128xf32>
    %208 = vector.shape_cast %207 : vector<1x128xf32> to vector<128xf32>
    %209 = vector.shape_cast %206 : vector<128xf32> to vector<1x128xf32>
    tpu.vector_store %arg9[%c29_88, %c0_89], %209 {strides = array<i32>} : memref<64x128xf32, #tpu.memory_space<vmem>>, vector<1x128xf32>,
    %c30 = arith.constant 30 : index
    %210 = memref.load %arg1[%c30] : memref<64xi32, #tpu.memory_space<smem>>
    %211 = arith.index_cast %210 : i32 to index
    %c0_90 = arith.constant 0 : index
    %212 = vector.load %arg2[%211, %c0_90] : memref<128x128xf32, #tpu.memory_space<vmem>>, vector<1x128xf32>
    %213 = vector.shape_cast %212 : vector<1x128xf32> to vector<128xf32>
    %c30_91 = arith.constant 30 : index
    %c0_92 = arith.constant 0 : index
    %214 = vector.load %arg9[%c30_91, %c0_92] : memref<64x128xf32, #tpu.memory_space<vmem>>, vector<1x128xf32>
    %215 = vector.shape_cast %214 : vector<1x128xf32> to vector<128xf32>
    %216 = vector.shape_cast %213 : vector<128xf32> to vector<1x128xf32>
    tpu.vector_store %arg9[%c30_91, %c0_92], %216 {strides = array<i32>} : memref<64x128xf32, #tpu.memory_space<vmem>>, vector<1x128xf32>,
    %c31 = arith.constant 31 : index
    %217 = memref.load %arg1[%c31] : memref<64xi32, #tpu.memory_space<smem>>
    %218 = arith.index_cast %217 : i32 to index
    %c0_93 = arith.constant 0 : index
    %219 = vector.load %arg2[%218, %c0_93] : memref<128x128xf32, #tpu.memory_space<vmem>>, vector<1x128xf32>
    %220 = vector.shape_cast %219 : vector<1x128xf32> to vector<128xf32>
    %c31_94 = arith.constant 31 : index
    %c0_95 = arith.constant 0 : index
    %221 = vector.load %arg9[%c31_94, %c0_95] : memref<64x128xf32, #tpu.memory_space<vmem>>, vector<1x128xf32>
    %222 = vector.shape_cast %221 : vector<1x128xf32> to vector<128xf32>
    %223 = vector.shape_cast %220 : vector<128xf32> to vector<1x128xf32>
    tpu.vector_store %arg9[%c31_94, %c0_95], %223 {strides = array<i32>} : memref<64x128xf32, #tpu.memory_space<vmem>>, vector<1x128xf32>,
    %c32 = arith.constant 32 : index
    %224 = memref.load %arg1[%c32] : memref<64xi32, #tpu.memory_space<smem>>
    %225 = arith.index_cast %224 : i32 to index
    %c0_96 = arith.constant 0 : index
    %226 = vector.load %arg2[%225, %c0_96] : memref<128x128xf32, #tpu.memory_space<vmem>>, vector<1x128xf32>
    %227 = vector.shape_cast %226 : vector<1x128xf32> to vector<128xf32>
    %c32_97 = arith.constant 32 : index
    %c0_98 = arith.constant 0 : index
    %228 = vector.load %arg9[%c32_97, %c0_98] : memref<64x128xf32, #tpu.memory_space<vmem>>, vector<1x128xf32>
    %229 = vector.shape_cast %228 : vector<1x128xf32> to vector<128xf32>
    %230 = vector.shape_cast %227 : vector<128xf32> to vector<1x128xf32>
    tpu.vector_store %arg9[%c32_97, %c0_98], %230 {strides = array<i32>} : memref<64x128xf32, #tpu.memory_space<vmem>>, vector<1x128xf32>,
    %c33 = arith.constant 33 : index
    %231 = memref.load %arg1[%c33] : memref<64xi32, #tpu.memory_space<smem>>
    %232 = arith.index_cast %231 : i32 to index
    %c0_99 = arith.constant 0 : index
    %233 = vector.load %arg2[%232, %c0_99] : memref<128x128xf32, #tpu.memory_space<vmem>>, vector<1x128xf32>
    %234 = vector.shape_cast %233 : vector<1x128xf32> to vector<128xf32>
    %c33_100 = arith.constant 33 : index
    %c0_101 = arith.constant 0 : index
    %235 = vector.load %arg9[%c33_100, %c0_101] : memref<64x128xf32, #tpu.memory_space<vmem>>, vector<1x128xf32>
    %236 = vector.shape_cast %235 : vector<1x128xf32> to vector<128xf32>
    %237 = vector.shape_cast %234 : vector<128xf32> to vector<1x128xf32>
    tpu.vector_store %arg9[%c33_100, %c0_101], %237 {strides = array<i32>} : memref<64x128xf32, #tpu.memory_space<vmem>>, vector<1x128xf32>,
    %c34 = arith.constant 34 : index
    %238 = memref.load %arg1[%c34] : memref<64xi32, #tpu.memory_space<smem>>
    %239 = arith.index_cast %238 : i32 to index
    %c0_102 = arith.constant 0 : index
    %240 = vector.load %arg2[%239, %c0_102] : memref<128x128xf32, #tpu.memory_space<vmem>>, vector<1x128xf32>
    %241 = vector.shape_cast %240 : vector<1x128xf32> to vector<128xf32>
    %c34_103 = arith.constant 34 : index
    %c0_104 = arith.constant 0 : index
    %242 = vector.load %arg9[%c34_103, %c0_104] : memref<64x128xf32, #tpu.memory_space<vmem>>, vector<1x128xf32>
    %243 = vector.shape_cast %242 : vector<1x128xf32> to vector<128xf32>
    %244 = vector.shape_cast %241 : vector<128xf32> to vector<1x128xf32>
    tpu.vector_store %arg9[%c34_103, %c0_104], %244 {strides = array<i32>} : memref<64x128xf32, #tpu.memory_space<vmem>>, vector<1x128xf32>,
    %c35 = arith.constant 35 : index
    %245 = memref.load %arg1[%c35] : memref<64xi32, #tpu.memory_space<smem>>
    %246 = arith.index_cast %245 : i32 to index
    %c0_105 = arith.constant 0 : index
    %247 = vector.load %arg2[%246, %c0_105] : memref<128x128xf32, #tpu.memory_space<vmem>>, vector<1x128xf32>
    %248 = vector.shape_cast %247 : vector<1x128xf32> to vector<128xf32>
    %c35_106 = arith.constant 35 : index
    %c0_107 = arith.constant 0 : index
    %249 = vector.load %arg9[%c35_106, %c0_107] : memref<64x128xf32, #tpu.memory_space<vmem>>, vector<1x128xf32>
    %250 = vector.shape_cast %249 : vector<1x128xf32> to vector<128xf32>
    %251 = vector.shape_cast %248 : vector<128xf32> to vector<1x128xf32>
    tpu.vector_store %arg9[%c35_106, %c0_107], %251 {strides = array<i32>} : memref<64x128xf32, #tpu.memory_space<vmem>>, vector<1x128xf32>,
    %c36 = arith.constant 36 : index
    %252 = memref.load %arg1[%c36] : memref<64xi32, #tpu.memory_space<smem>>
    %253 = arith.index_cast %252 : i32 to index
    %c0_108 = arith.constant 0 : index
    %254 = vector.load %arg2[%253, %c0_108] : memref<128x128xf32, #tpu.memory_space<vmem>>, vector<1x128xf32>
    %255 = vector.shape_cast %254 : vector<1x128xf32> to vector<128xf32>
    %c36_109 = arith.constant 36 : index
    %c0_110 = arith.constant 0 : index
    %256 = vector.load %arg9[%c36_109, %c0_110] : memref<64x128xf32, #tpu.memory_space<vmem>>, vector<1x128xf32>
    %257 = vector.shape_cast %256 : vector<1x128xf32> to vector<128xf32>
    %258 = vector.shape_cast %255 : vector<128xf32> to vector<1x128xf32>
    tpu.vector_store %arg9[%c36_109, %c0_110], %258 {strides = array<i32>} : memref<64x128xf32, #tpu.memory_space<vmem>>, vector<1x128xf32>,
    %c37 = arith.constant 37 : index
    %259 = memref.load %arg1[%c37] : memref<64xi32, #tpu.memory_space<smem>>
    %260 = arith.index_cast %259 : i32 to index
    %c0_111 = arith.constant 0 : index
    %261 = vector.load %arg2[%260, %c0_111] : memref<128x128xf32, #tpu.memory_space<vmem>>, vector<1x128xf32>
    %262 = vector.shape_cast %261 : vector<1x128xf32> to vector<128xf32>
    %c37_112 = arith.constant 37 : index
    %c0_113 = arith.constant 0 : index
    %263 = vector.load %arg9[%c37_112, %c0_113] : memref<64x128xf32, #tpu.memory_space<vmem>>, vector<1x128xf32>
    %264 = vector.shape_cast %263 : vector<1x128xf32> to vector<128xf32>
    %265 = vector.shape_cast %262 : vector<128xf32> to vector<1x128xf32>
    tpu.vector_store %arg9[%c37_112, %c0_113], %265 {strides = array<i32>} : memref<64x128xf32, #tpu.memory_space<vmem>>, vector<1x128xf32>,
    %c38 = arith.constant 38 : index
    %266 = memref.load %arg1[%c38] : memref<64xi32, #tpu.memory_space<smem>>
    %267 = arith.index_cast %266 : i32 to index
    %c0_114 = arith.constant 0 : index
    %268 = vector.load %arg2[%267, %c0_114] : memref<128x128xf32, #tpu.memory_space<vmem>>, vector<1x128xf32>
    %269 = vector.shape_cast %268 : vector<1x128xf32> to vector<128xf32>
    %c38_115 = arith.constant 38 : index
    %c0_116 = arith.constant 0 : index
    %270 = vector.load %arg9[%c38_115, %c0_116] : memref<64x128xf32, #tpu.memory_space<vmem>>, vector<1x128xf32>
    %271 = vector.shape_cast %270 : vector<1x128xf32> to vector<128xf32>
    %272 = vector.shape_cast %269 : vector<128xf32> to vector<1x128xf32>
    tpu.vector_store %arg9[%c38_115, %c0_116], %272 {strides = array<i32>} : memref<64x128xf32, #tpu.memory_space<vmem>>, vector<1x128xf32>,
    %c39 = arith.constant 39 : index
    %273 = memref.load %arg1[%c39] : memref<64xi32, #tpu.memory_space<smem>>
    %274 = arith.index_cast %273 : i32 to index
    %c0_117 = arith.constant 0 : index
    %275 = vector.load %arg2[%274, %c0_117] : memref<128x128xf32, #tpu.memory_space<vmem>>, vector<1x128xf32>
    %276 = vector.shape_cast %275 : vector<1x128xf32> to vector<128xf32>
    %c39_118 = arith.constant 39 : index
    %c0_119 = arith.constant 0 : index
    %277 = vector.load %arg9[%c39_118, %c0_119] : memref<64x128xf32, #tpu.memory_space<vmem>>, vector<1x128xf32>
    %278 = vector.shape_cast %277 : vector<1x128xf32> to vector<128xf32>
    %279 = vector.shape_cast %276 : vector<128xf32> to vector<1x128xf32>
    tpu.vector_store %arg9[%c39_118, %c0_119], %279 {strides = array<i32>} : memref<64x128xf32, #tpu.memory_space<vmem>>, vector<1x128xf32>,
    %c40 = arith.constant 40 : index
    %280 = memref.load %arg1[%c40] : memref<64xi32, #tpu.memory_space<smem>>
    %281 = arith.index_cast %280 : i32 to index
    %c0_120 = arith.constant 0 : index
    %282 = vector.load %arg2[%281, %c0_120] : memref<128x128xf32, #tpu.memory_space<vmem>>, vector<1x128xf32>
    %283 = vector.shape_cast %282 : vector<1x128xf32> to vector<128xf32>
    %c40_121 = arith.constant 40 : index
    %c0_122 = arith.constant 0 : index
    %284 = vector.load %arg9[%c40_121, %c0_122] : memref<64x128xf32, #tpu.memory_space<vmem>>, vector<1x128xf32>
    %285 = vector.shape_cast %284 : vector<1x128xf32> to vector<128xf32>
    %286 = vector.shape_cast %283 : vector<128xf32> to vector<1x128xf32>
    tpu.vector_store %arg9[%c40_121, %c0_122], %286 {strides = array<i32>} : memref<64x128xf32, #tpu.memory_space<vmem>>, vector<1x128xf32>,
    %c41 = arith.constant 41 : index
    %287 = memref.load %arg1[%c41] : memref<64xi32, #tpu.memory_space<smem>>
    %288 = arith.index_cast %287 : i32 to index
    %c0_123 = arith.constant 0 : index
    %289 = vector.load %arg2[%288, %c0_123] : memref<128x128xf32, #tpu.memory_space<vmem>>, vector<1x128xf32>
    %290 = vector.shape_cast %289 : vector<1x128xf32> to vector<128xf32>
    %c41_124 = arith.constant 41 : index
    %c0_125 = arith.constant 0 : index
    %291 = vector.load %arg9[%c41_124, %c0_125] : memref<64x128xf32, #tpu.memory_space<vmem>>, vector<1x128xf32>
    %292 = vector.shape_cast %291 : vector<1x128xf32> to vector<128xf32>
    %293 = vector.shape_cast %290 : vector<128xf32> to vector<1x128xf32>
    tpu.vector_store %arg9[%c41_124, %c0_125], %293 {strides = array<i32>} : memref<64x128xf32, #tpu.memory_space<vmem>>, vector<1x128xf32>,
    %c42 = arith.constant 42 : index
    %294 = memref.load %arg1[%c42] : memref<64xi32, #tpu.memory_space<smem>>
    %295 = arith.index_cast %294 : i32 to index
    %c0_126 = arith.constant 0 : index
    %296 = vector.load %arg2[%295, %c0_126] : memref<128x128xf32, #tpu.memory_space<vmem>>, vector<1x128xf32>
    %297 = vector.shape_cast %296 : vector<1x128xf32> to vector<128xf32>
    %c42_127 = arith.constant 42 : index
    %c0_128 = arith.constant 0 : index
    %298 = vector.load %arg9[%c42_127, %c0_128] : memref<64x128xf32, #tpu.memory_space<vmem>>, vector<1x128xf32>
    %299 = vector.shape_cast %298 : vector<1x128xf32> to vector<128xf32>
    %300 = vector.shape_cast %297 : vector<128xf32> to vector<1x128xf32>
    tpu.vector_store %arg9[%c42_127, %c0_128], %300 {strides = array<i32>} : memref<64x128xf32, #tpu.memory_space<vmem>>, vector<1x128xf32>,
    %c43 = arith.constant 43 : index
    %301 = memref.load %arg1[%c43] : memref<64xi32, #tpu.memory_space<smem>>
    %302 = arith.index_cast %301 : i32 to index
    %c0_129 = arith.constant 0 : index
    %303 = vector.load %arg2[%302, %c0_129] : memref<128x128xf32, #tpu.memory_space<vmem>>, vector<1x128xf32>
    %304 = vector.shape_cast %303 : vector<1x128xf32> to vector<128xf32>
    %c43_130 = arith.constant 43 : index
    %c0_131 = arith.constant 0 : index
    %305 = vector.load %arg9[%c43_130, %c0_131] : memref<64x128xf32, #tpu.memory_space<vmem>>, vector<1x128xf32>
    %306 = vector.shape_cast %305 : vector<1x128xf32> to vector<128xf32>
    %307 = vector.shape_cast %304 : vector<128xf32> to vector<1x128xf32>
    tpu.vector_store %arg9[%c43_130, %c0_131], %307 {strides = array<i32>} : memref<64x128xf32, #tpu.memory_space<vmem>>, vector<1x128xf32>,
    %c44 = arith.constant 44 : index
    %308 = memref.load %arg1[%c44] : memref<64xi32, #tpu.memory_space<smem>>
    %309 = arith.index_cast %308 : i32 to index
    %c0_132 = arith.constant 0 : index
    %310 = vector.load %arg2[%309, %c0_132] : memref<128x128xf32, #tpu.memory_space<vmem>>, vector<1x128xf32>
    %311 = vector.shape_cast %310 : vector<1x128xf32> to vector<128xf32>
    %c44_133 = arith.constant 44 : index
    %c0_134 = arith.constant 0 : index
    %312 = vector.load %arg9[%c44_133, %c0_134] : memref<64x128xf32, #tpu.memory_space<vmem>>, vector<1x128xf32>
    %313 = vector.shape_cast %312 : vector<1x128xf32> to vector<128xf32>
    %314 = vector.shape_cast %311 : vector<128xf32> to vector<1x128xf32>
    tpu.vector_store %arg9[%c44_133, %c0_134], %314 {strides = array<i32>} : memref<64x128xf32, #tpu.memory_space<vmem>>, vector<1x128xf32>,
    %c45 = arith.constant 45 : index
    %315 = memref.load %arg1[%c45] : memref<64xi32, #tpu.memory_space<smem>>
    %316 = arith.index_cast %315 : i32 to index
    %c0_135 = arith.constant 0 : index
    %317 = vector.load %arg2[%316, %c0_135] : memref<128x128xf32, #tpu.memory_space<vmem>>, vector<1x128xf32>
    %318 = vector.shape_cast %317 : vector<1x128xf32> to vector<128xf32>
    %c45_136 = arith.constant 45 : index
    %c0_137 = arith.constant 0 : index
    %319 = vector.load %arg9[%c45_136, %c0_137] : memref<64x128xf32, #tpu.memory_space<vmem>>, vector<1x128xf32>
    %320 = vector.shape_cast %319 : vector<1x128xf32> to vector<128xf32>
    %321 = vector.shape_cast %318 : vector<128xf32> to vector<1x128xf32>
    tpu.vector_store %arg9[%c45_136, %c0_137], %321 {strides = array<i32>} : memref<64x128xf32, #tpu.memory_space<vmem>>, vector<1x128xf32>,
    %c46 = arith.constant 46 : index
    %322 = memref.load %arg1[%c46] : memref<64xi32, #tpu.memory_space<smem>>
    %323 = arith.index_cast %322 : i32 to index
    %c0_138 = arith.constant 0 : index
    %324 = vector.load %arg2[%323, %c0_138] : memref<128x128xf32, #tpu.memory_space<vmem>>, vector<1x128xf32>
    %325 = vector.shape_cast %324 : vector<1x128xf32> to vector<128xf32>
    %c46_139 = arith.constant 46 : index
    %c0_140 = arith.constant 0 : index
    %326 = vector.load %arg9[%c46_139, %c0_140] : memref<64x128xf32, #tpu.memory_space<vmem>>, vector<1x128xf32>
    %327 = vector.shape_cast %326 : vector<1x128xf32> to vector<128xf32>
    %328 = vector.shape_cast %325 : vector<128xf32> to vector<1x128xf32>
    tpu.vector_store %arg9[%c46_139, %c0_140], %328 {strides = array<i32>} : memref<64x128xf32, #tpu.memory_space<vmem>>, vector<1x128xf32>,
    %c47 = arith.constant 47 : index
    %329 = memref.load %arg1[%c47] : memref<64xi32, #tpu.memory_space<smem>>
    %330 = arith.index_cast %329 : i32 to index
    %c0_141 = arith.constant 0 : index
    %331 = vector.load %arg2[%330, %c0_141] : memref<128x128xf32, #tpu.memory_space<vmem>>, vector<1x128xf32>
    %332 = vector.shape_cast %331 : vector<1x128xf32> to vector<128xf32>
    %c47_142 = arith.constant 47 : index
    %c0_143 = arith.constant 0 : index
    %333 = vector.load %arg9[%c47_142, %c0_143] : memref<64x128xf32, #tpu.memory_space<vmem>>, vector<1x128xf32>
    %334 = vector.shape_cast %333 : vector<1x128xf32> to vector<128xf32>
    %335 = vector.shape_cast %332 : vector<128xf32> to vector<1x128xf32>
    tpu.vector_store %arg9[%c47_142, %c0_143], %335 {strides = array<i32>} : memref<64x128xf32, #tpu.memory_space<vmem>>, vector<1x128xf32>,
    %c48 = arith.constant 48 : index
    %336 = memref.load %arg1[%c48] : memref<64xi32, #tpu.memory_space<smem>>
    %337 = arith.index_cast %336 : i32 to index
    %c0_144 = arith.constant 0 : index
    %338 = vector.load %arg2[%337, %c0_144] : memref<128x128xf32, #tpu.memory_space<vmem>>, vector<1x128xf32>
    %339 = vector.shape_cast %338 : vector<1x128xf32> to vector<128xf32>
    %c48_145 = arith.constant 48 : index
    %c0_146 = arith.constant 0 : index
    %340 = vector.load %arg9[%c48_145, %c0_146] : memref<64x128xf32, #tpu.memory_space<vmem>>, vector<1x128xf32>
    %341 = vector.shape_cast %340 : vector<1x128xf32> to vector<128xf32>
    %342 = vector.shape_cast %339 : vector<128xf32> to vector<1x128xf32>
    tpu.vector_store %arg9[%c48_145, %c0_146], %342 {strides = array<i32>} : memref<64x128xf32, #tpu.memory_space<vmem>>, vector<1x128xf32>,
    %c49 = arith.constant 49 : index
    %343 = memref.load %arg1[%c49] : memref<64xi32, #tpu.memory_space<smem>>
    %344 = arith.index_cast %343 : i32 to index
    %c0_147 = arith.constant 0 : index
    %345 = vector.load %arg2[%344, %c0_147] : memref<128x128xf32, #tpu.memory_space<vmem>>, vector<1x128xf32>
    %346 = vector.shape_cast %345 : vector<1x128xf32> to vector<128xf32>
    %c49_148 = arith.constant 49 : index
    %c0_149 = arith.constant 0 : index
    %347 = vector.load %arg9[%c49_148, %c0_149] : memref<64x128xf32, #tpu.memory_space<vmem>>, vector<1x128xf32>
    %348 = vector.shape_cast %347 : vector<1x128xf32> to vector<128xf32>
    %349 = vector.shape_cast %346 : vector<128xf32> to vector<1x128xf32>
    tpu.vector_store %arg9[%c49_148, %c0_149], %349 {strides = array<i32>} : memref<64x128xf32, #tpu.memory_space<vmem>>, vector<1x128xf32>,
    %c50 = arith.constant 50 : index
    %350 = memref.load %arg1[%c50] : memref<64xi32, #tpu.memory_space<smem>>
    %351 = arith.index_cast %350 : i32 to index
    %c0_150 = arith.constant 0 : index
    %352 = vector.load %arg2[%351, %c0_150] : memref<128x128xf32, #tpu.memory_space<vmem>>, vector<1x128xf32>
    %353 = vector.shape_cast %352 : vector<1x128xf32> to vector<128xf32>
    %c50_151 = arith.constant 50 : index
    %c0_152 = arith.constant 0 : index
    %354 = vector.load %arg9[%c50_151, %c0_152] : memref<64x128xf32, #tpu.memory_space<vmem>>, vector<1x128xf32>
    %355 = vector.shape_cast %354 : vector<1x128xf32> to vector<128xf32>
    %356 = vector.shape_cast %353 : vector<128xf32> to vector<1x128xf32>
    tpu.vector_store %arg9[%c50_151, %c0_152], %356 {strides = array<i32>} : memref<64x128xf32, #tpu.memory_space<vmem>>, vector<1x128xf32>,
    %c51 = arith.constant 51 : index
    %357 = memref.load %arg1[%c51] : memref<64xi32, #tpu.memory_space<smem>>
    %358 = arith.index_cast %357 : i32 to index
    %c0_153 = arith.constant 0 : index
    %359 = vector.load %arg2[%358, %c0_153] : memref<128x128xf32, #tpu.memory_space<vmem>>, vector<1x128xf32>
    %360 = vector.shape_cast %359 : vector<1x128xf32> to vector<128xf32>
    %c51_154 = arith.constant 51 : index
    %c0_155 = arith.constant 0 : index
    %361 = vector.load %arg9[%c51_154, %c0_155] : memref<64x128xf32, #tpu.memory_space<vmem>>, vector<1x128xf32>
    %362 = vector.shape_cast %361 : vector<1x128xf32> to vector<128xf32>
    %363 = vector.shape_cast %360 : vector<128xf32> to vector<1x128xf32>
    tpu.vector_store %arg9[%c51_154, %c0_155], %363 {strides = array<i32>} : memref<64x128xf32, #tpu.memory_space<vmem>>, vector<1x128xf32>,
    %c52 = arith.constant 52 : index
    %364 = memref.load %arg1[%c52] : memref<64xi32, #tpu.memory_space<smem>>
    %365 = arith.index_cast %364 : i32 to index
    %c0_156 = arith.constant 0 : index
    %366 = vector.load %arg2[%365, %c0_156] : memref<128x128xf32, #tpu.memory_space<vmem>>, vector<1x128xf32>
    %367 = vector.shape_cast %366 : vector<1x128xf32> to vector<128xf32>
    %c52_157 = arith.constant 52 : index
    %c0_158 = arith.constant 0 : index
    %368 = vector.load %arg9[%c52_157, %c0_158] : memref<64x128xf32, #tpu.memory_space<vmem>>, vector<1x128xf32>
    %369 = vector.shape_cast %368 : vector<1x128xf32> to vector<128xf32>
    %370 = vector.shape_cast %367 : vector<128xf32> to vector<1x128xf32>
    tpu.vector_store %arg9[%c52_157, %c0_158], %370 {strides = array<i32>} : memref<64x128xf32, #tpu.memory_space<vmem>>, vector<1x128xf32>,
    %c53 = arith.constant 53 : index
    %371 = memref.load %arg1[%c53] : memref<64xi32, #tpu.memory_space<smem>>
    %372 = arith.index_cast %371 : i32 to index
    %c0_159 = arith.constant 0 : index
    %373 = vector.load %arg2[%372, %c0_159] : memref<128x128xf32, #tpu.memory_space<vmem>>, vector<1x128xf32>
    %374 = vector.shape_cast %373 : vector<1x128xf32> to vector<128xf32>
    %c53_160 = arith.constant 53 : index
    %c0_161 = arith.constant 0 : index
    %375 = vector.load %arg9[%c53_160, %c0_161] : memref<64x128xf32, #tpu.memory_space<vmem>>, vector<1x128xf32>
    %376 = vector.shape_cast %375 : vector<1x128xf32> to vector<128xf32>
    %377 = vector.shape_cast %374 : vector<128xf32> to vector<1x128xf32>
    tpu.vector_store %arg9[%c53_160, %c0_161], %377 {strides = array<i32>} : memref<64x128xf32, #tpu.memory_space<vmem>>, vector<1x128xf32>,
    %c54 = arith.constant 54 : index
    %378 = memref.load %arg1[%c54] : memref<64xi32, #tpu.memory_space<smem>>
    %379 = arith.index_cast %378 : i32 to index
    %c0_162 = arith.constant 0 : index
    %380 = vector.load %arg2[%379, %c0_162] : memref<128x128xf32, #tpu.memory_space<vmem>>, vector<1x128xf32>
    %381 = vector.shape_cast %380 : vector<1x128xf32> to vector<128xf32>
    %c54_163 = arith.constant 54 : index
    %c0_164 = arith.constant 0 : index
    %382 = vector.load %arg9[%c54_163, %c0_164] : memref<64x128xf32, #tpu.memory_space<vmem>>, vector<1x128xf32>
    %383 = vector.shape_cast %382 : vector<1x128xf32> to vector<128xf32>
    %384 = vector.shape_cast %381 : vector<128xf32> to vector<1x128xf32>
    tpu.vector_store %arg9[%c54_163, %c0_164], %384 {strides = array<i32>} : memref<64x128xf32, #tpu.memory_space<vmem>>, vector<1x128xf32>,
    %c55 = arith.constant 55 : index
    %385 = memref.load %arg1[%c55] : memref<64xi32, #tpu.memory_space<smem>>
    %386 = arith.index_cast %385 : i32 to index
    %c0_165 = arith.constant 0 : index
    %387 = vector.load %arg2[%386, %c0_165] : memref<128x128xf32, #tpu.memory_space<vmem>>, vector<1x128xf32>
    %388 = vector.shape_cast %387 : vector<1x128xf32> to vector<128xf32>
    %c55_166 = arith.constant 55 : index
    %c0_167 = arith.constant 0 : index
    %389 = vector.load %arg9[%c55_166, %c0_167] : memref<64x128xf32, #tpu.memory_space<vmem>>, vector<1x128xf32>
    %390 = vector.shape_cast %389 : vector<1x128xf32> to vector<128xf32>
    %391 = vector.shape_cast %388 : vector<128xf32> to vector<1x128xf32>
    tpu.vector_store %arg9[%c55_166, %c0_167], %391 {strides = array<i32>} : memref<64x128xf32, #tpu.memory_space<vmem>>, vector<1x128xf32>,
    %c56 = arith.constant 56 : index
    %392 = memref.load %arg1[%c56] : memref<64xi32, #tpu.memory_space<smem>>
    %393 = arith.index_cast %392 : i32 to index
    %c0_168 = arith.constant 0 : index
    %394 = vector.load %arg2[%393, %c0_168] : memref<128x128xf32, #tpu.memory_space<vmem>>, vector<1x128xf32>
    %395 = vector.shape_cast %394 : vector<1x128xf32> to vector<128xf32>
    %c56_169 = arith.constant 56 : index
    %c0_170 = arith.constant 0 : index
    %396 = vector.load %arg9[%c56_169, %c0_170] : memref<64x128xf32, #tpu.memory_space<vmem>>, vector<1x128xf32>
    %397 = vector.shape_cast %396 : vector<1x128xf32> to vector<128xf32>
    %398 = vector.shape_cast %395 : vector<128xf32> to vector<1x128xf32>
    tpu.vector_store %arg9[%c56_169, %c0_170], %398 {strides = array<i32>} : memref<64x128xf32, #tpu.memory_space<vmem>>, vector<1x128xf32>,
    %c57 = arith.constant 57 : index
    %399 = memref.load %arg1[%c57] : memref<64xi32, #tpu.memory_space<smem>>
    %400 = arith.index_cast %399 : i32 to index
    %c0_171 = arith.constant 0 : index
    %401 = vector.load %arg2[%400, %c0_171] : memref<128x128xf32, #tpu.memory_space<vmem>>, vector<1x128xf32>
    %402 = vector.shape_cast %401 : vector<1x128xf32> to vector<128xf32>
    %c57_172 = arith.constant 57 : index
    %c0_173 = arith.constant 0 : index
    %403 = vector.load %arg9[%c57_172, %c0_173] : memref<64x128xf32, #tpu.memory_space<vmem>>, vector<1x128xf32>
    %404 = vector.shape_cast %403 : vector<1x128xf32> to vector<128xf32>
    %405 = vector.shape_cast %402 : vector<128xf32> to vector<1x128xf32>
    tpu.vector_store %arg9[%c57_172, %c0_173], %405 {strides = array<i32>} : memref<64x128xf32, #tpu.memory_space<vmem>>, vector<1x128xf32>,
    %c58 = arith.constant 58 : index
    %406 = memref.load %arg1[%c58] : memref<64xi32, #tpu.memory_space<smem>>
    %407 = arith.index_cast %406 : i32 to index
    %c0_174 = arith.constant 0 : index
    %408 = vector.load %arg2[%407, %c0_174] : memref<128x128xf32, #tpu.memory_space<vmem>>, vector<1x128xf32>
    %409 = vector.shape_cast %408 : vector<1x128xf32> to vector<128xf32>
    %c58_175 = arith.constant 58 : index
    %c0_176 = arith.constant 0 : index
    %410 = vector.load %arg9[%c58_175, %c0_176] : memref<64x128xf32, #tpu.memory_space<vmem>>, vector<1x128xf32>
    %411 = vector.shape_cast %410 : vector<1x128xf32> to vector<128xf32>
    %412 = vector.shape_cast %409 : vector<128xf32> to vector<1x128xf32>
    tpu.vector_store %arg9[%c58_175, %c0_176], %412 {strides = array<i32>} : memref<64x128xf32, #tpu.memory_space<vmem>>, vector<1x128xf32>,
    %c59 = arith.constant 59 : index
    %413 = memref.load %arg1[%c59] : memref<64xi32, #tpu.memory_space<smem>>
    %414 = arith.index_cast %413 : i32 to index
    %c0_177 = arith.constant 0 : index
    %415 = vector.load %arg2[%414, %c0_177] : memref<128x128xf32, #tpu.memory_space<vmem>>, vector<1x128xf32>
    %416 = vector.shape_cast %415 : vector<1x128xf32> to vector<128xf32>
    %c59_178 = arith.constant 59 : index
    %c0_179 = arith.constant 0 : index
    %417 = vector.load %arg9[%c59_178, %c0_179] : memref<64x128xf32, #tpu.memory_space<vmem>>, vector<1x128xf32>
    %418 = vector.shape_cast %417 : vector<1x128xf32> to vector<128xf32>
    %419 = vector.shape_cast %416 : vector<128xf32> to vector<1x128xf32>
    tpu.vector_store %arg9[%c59_178, %c0_179], %419 {strides = array<i32>} : memref<64x128xf32, #tpu.memory_space<vmem>>, vector<1x128xf32>,
    %c60 = arith.constant 60 : index
    %420 = memref.load %arg1[%c60] : memref<64xi32, #tpu.memory_space<smem>>
    %421 = arith.index_cast %420 : i32 to index
    %c0_180 = arith.constant 0 : index
    %422 = vector.load %arg2[%421, %c0_180] : memref<128x128xf32, #tpu.memory_space<vmem>>, vector<1x128xf32>
    %423 = vector.shape_cast %422 : vector<1x128xf32> to vector<128xf32>
    %c60_181 = arith.constant 60 : index
    %c0_182 = arith.constant 0 : index
    %424 = vector.load %arg9[%c60_181, %c0_182] : memref<64x128xf32, #tpu.memory_space<vmem>>, vector<1x128xf32>
    %425 = vector.shape_cast %424 : vector<1x128xf32> to vector<128xf32>
    %426 = vector.shape_cast %423 : vector<128xf32> to vector<1x128xf32>
    tpu.vector_store %arg9[%c60_181, %c0_182], %426 {strides = array<i32>} : memref<64x128xf32, #tpu.memory_space<vmem>>, vector<1x128xf32>,
    %c61 = arith.constant 61 : index
    %427 = memref.load %arg1[%c61] : memref<64xi32, #tpu.memory_space<smem>>
    %428 = arith.index_cast %427 : i32 to index
    %c0_183 = arith.constant 0 : index
    %429 = vector.load %arg2[%428, %c0_183] : memref<128x128xf32, #tpu.memory_space<vmem>>, vector<1x128xf32>
    %430 = vector.shape_cast %429 : vector<1x128xf32> to vector<128xf32>
    %c61_184 = arith.constant 61 : index
    %c0_185 = arith.constant 0 : index
    %431 = vector.load %arg9[%c61_184, %c0_185] : memref<64x128xf32, #tpu.memory_space<vmem>>, vector<1x128xf32>
    %432 = vector.shape_cast %431 : vector<1x128xf32> to vector<128xf32>
    %433 = vector.shape_cast %430 : vector<128xf32> to vector<1x128xf32>
    tpu.vector_store %arg9[%c61_184, %c0_185], %433 {strides = array<i32>} : memref<64x128xf32, #tpu.memory_space<vmem>>, vector<1x128xf32>,
    %c62 = arith.constant 62 : index
    %434 = memref.load %arg1[%c62] : memref<64xi32, #tpu.memory_space<smem>>
    %435 = arith.index_cast %434 : i32 to index
    %c0_186 = arith.constant 0 : index
    %436 = vector.load %arg2[%435, %c0_186] : memref<128x128xf32, #tpu.memory_space<vmem>>, vector<1x128xf32>
    %437 = vector.shape_cast %436 : vector<1x128xf32> to vector<128xf32>
    %c62_187 = arith.constant 62 : index
    %c0_188 = arith.constant 0 : index
    %438 = vector.load %arg9[%c62_187, %c0_188] : memref<64x128xf32, #tpu.memory_space<vmem>>, vector<1x128xf32>
    %439 = vector.shape_cast %438 : vector<1x128xf32> to vector<128xf32>
    %440 = vector.shape_cast %437 : vector<128xf32> to vector<1x128xf32>
    tpu.vector_store %arg9[%c62_187, %c0_188], %440 {strides = array<i32>} : memref<64x128xf32, #tpu.memory_space<vmem>>, vector<1x128xf32>,
    %c63 = arith.constant 63 : index
    %441 = memref.load %arg1[%c63] : memref<64xi32, #tpu.memory_space<smem>>
    %442 = arith.index_cast %441 : i32 to index
    %c0_189 = arith.constant 0 : index
    %443 = vector.load %arg2[%442, %c0_189] : memref<128x128xf32, #tpu.memory_space<vmem>>, vector<1x128xf32>
    %444 = vector.shape_cast %443 : vector<1x128xf32> to vector<128xf32>
    %c63_190 = arith.constant 63 : index
    %c0_191 = arith.constant 0 : index
    %445 = vector.load %arg9[%c63_190, %c0_191] : memref<64x128xf32, #tpu.memory_space<vmem>>, vector<1x128xf32>
    %446 = vector.shape_cast %445 : vector<1x128xf32> to vector<128xf32>
    %447 = vector.shape_cast %444 : vector<128xf32> to vector<1x128xf32>
    tpu.vector_store %arg9[%c63_190, %c0_191], %447 {strides = array<i32>} : memref<64x128xf32, #tpu.memory_space<vmem>>, vector<1x128xf32>,
    %c0_192 = arith.constant 0 : index
    %c0_193 = arith.constant 0 : index
    %448 = vector.load %arg9[%c0_192, %c0_193] : memref<64x128xf32, #tpu.memory_space<vmem>>, vector<64x128xf32>
    %449 = arith.truncf %448 : vector<64x128xf32> to vector<64x128xbf16>
    %c0_194 = arith.constant 0 : index
    %c0_195 = arith.constant 0 : index
    %450 = vector.load %arg3[%c0_194, %c0_195] : memref<128x128xbf16, #tpu.memory_space<vmem>>, vector<128x128xbf16>
    %cst = arith.constant dense<0.000000e+00> : vector<64x128xf32>
    %451 = tpu.matmul %449, %450, %cst {dimension_numbers = #tpu.dot_dimension_numbers<[1], [0], [0], [1], [0, 0, 1, 1], [], []>} : vector<64x128xbf16>, vector<128x128xbf16>, vector<64x128xf32> -> vector<64x128xf32>
    %c0_196 = arith.constant 0 : index
    %c0_197 = arith.constant 0 : index
    %452 = vector.load %arg5[%c0_196, %c0_197] : memref<1x128xf32, #tpu.memory_space<vmem>>, vector<1x128xf32>
    %453 = vector.broadcast %452 : vector<1x128xf32> to vector<64x128xf32>
    %454 = arith.addf %451, %453 : vector<64x128xf32>
    %455 = vector.shape_cast %454 : vector<64x128xf32> to vector<8x8x128xf32>
    %c0_198 = arith.constant 0 : index
    %c0_199 = arith.constant 0 : index
    %c0_200 = arith.constant 0 : index
    %456 = vector.load %arg10[%c0_198, %c0_199, %c0_200] : memref<8x8x128xf32, #tpu.memory_space<vmem>>, vector<8x8x128xf32>
    tpu.vector_store %arg10[%c0_198, %c0_199, %c0_200], %455 {strides = array<i32>} : memref<8x8x128xf32, #tpu.memory_space<vmem>>, vector<8x8x128xf32>,
    %c0_201 = arith.constant 0 : index
    %c0_202 = arith.constant 0 : index
    %457 = vector.load %arg4[%c0_201, %c0_202] : memref<128x128xbf16, #tpu.memory_space<vmem>>, vector<128x128xbf16>
    %cst_203 = arith.constant 0.000000e+00 : f32
    %458 = vector.broadcast %cst_203 : f32 to vector<8x128xf32>
    %c0_204 = arith.constant 0 : index
    %c0_205 = arith.constant 0 : index
    %c0_206 = arith.constant 0 : index
    %459 = vector.load %arg10[%c0_204, %c0_205, %c0_206] : memref<8x8x128xf32, #tpu.memory_space<vmem>>, vector<1x8x128xf32>
    %460 = vector.shape_cast %459 : vector<1x8x128xf32> to vector<8x128xf32>
    %461 = arith.truncf %458 : vector<8x128xf32> to vector<8x128xbf16>
    %cst_207 = arith.constant dense<0.000000e+00> : vector<8x128xf32>
    %462 = tpu.matmul %461, %457, %cst_207 {dimension_numbers = #tpu.dot_dimension_numbers<[1], [0], [0], [1], [0, 0, 1, 1], [], []>} : vector<8x128xbf16>, vector<128x128xbf16>, vector<8x128xf32> -> vector<8x128xf32>
    %463 = arith.addf %460, %462 : vector<8x128xf32>
    %464 = math.tanh %463 : vector<8x128xf32>
    %465 = vector.shape_cast %464 : vector<8x128xf32> to vector<8x1x128xf32>
    %c0_208 = arith.constant 0 : index
    %c0_209 = arith.constant 0 : index
    %c0_210 = arith.constant 0 : index
    %466 = vector.load %arg11[%c0_208, %c0_209, %c0_210] : memref<8x8x128xf32, #tpu.memory_space<vmem>>, vector<8x1x128xf32>
    tpu.vector_store %arg11[%c0_208, %c0_209, %c0_210], %465 {strides = array<i32>} : memref<8x8x128xf32, #tpu.memory_space<vmem>>, vector<8x1x128xf32>,
    %c1_211 = arith.constant 1 : index
    %c0_212 = arith.constant 0 : index
    %c0_213 = arith.constant 0 : index
    %467 = vector.load %arg10[%c1_211, %c0_212, %c0_213] : memref<8x8x128xf32, #tpu.memory_space<vmem>>, vector<1x8x128xf32>
    %468 = vector.shape_cast %467 : vector<1x8x128xf32> to vector<8x128xf32>
    %469 = arith.truncf %464 : vector<8x128xf32> to vector<8x128xbf16>
    %cst_214 = arith.constant dense<0.000000e+00> : vector<8x128xf32>
    %470 = tpu.matmul %469, %457, %cst_214 {dimension_numbers = #tpu.dot_dimension_numbers<[1], [0], [0], [1], [0, 0, 1, 1], [], []>} : vector<8x128xbf16>, vector<128x128xbf16>, vector<8x128xf32> -> vector<8x128xf32>
    %471 = arith.addf %468, %470 : vector<8x128xf32>
    %472 = math.tanh %471 : vector<8x128xf32>
    %473 = vector.shape_cast %472 : vector<8x128xf32> to vector<8x1x128xf32>
    %c0_215 = arith.constant 0 : index
    %c1_216 = arith.constant 1 : index
    %c0_217 = arith.constant 0 : index
    %474 = vector.load %arg11[%c0_215, %c1_216, %c0_217] : memref<8x8x128xf32, #tpu.memory_space<vmem>>, vector<8x1x128xf32>
    tpu.vector_store %arg11[%c0_215, %c1_216, %c0_217], %473 {strides = array<i32>} : memref<8x8x128xf32, #tpu.memory_space<vmem>>, vector<8x1x128xf32>,
    %c2_218 = arith.constant 2 : index
    %c0_219 = arith.constant 0 : index
    %c0_220 = arith.constant 0 : index
    %475 = vector.load %arg10[%c2_218, %c0_219, %c0_220] : memref<8x8x128xf32, #tpu.memory_space<vmem>>, vector<1x8x128xf32>
    %476 = vector.shape_cast %475 : vector<1x8x128xf32> to vector<8x128xf32>
    %477 = arith.truncf %472 : vector<8x128xf32> to vector<8x128xbf16>
    %cst_221 = arith.constant dense<0.000000e+00> : vector<8x128xf32>
    %478 = tpu.matmul %477, %457, %cst_221 {dimension_numbers = #tpu.dot_dimension_numbers<[1], [0], [0], [1], [0, 0, 1, 1], [], []>} : vector<8x128xbf16>, vector<128x128xbf16>, vector<8x128xf32> -> vector<8x128xf32>
    %479 = arith.addf %476, %478 : vector<8x128xf32>
    %480 = math.tanh %479 : vector<8x128xf32>
    %481 = vector.shape_cast %480 : vector<8x128xf32> to vector<8x1x128xf32>
    %c0_222 = arith.constant 0 : index
    %c2_223 = arith.constant 2 : index
    %c0_224 = arith.constant 0 : index
    %482 = vector.load %arg11[%c0_222, %c2_223, %c0_224] : memref<8x8x128xf32, #tpu.memory_space<vmem>>, vector<8x1x128xf32>
    tpu.vector_store %arg11[%c0_222, %c2_223, %c0_224], %481 {strides = array<i32>} : memref<8x8x128xf32, #tpu.memory_space<vmem>>, vector<8x1x128xf32>,
    %c3_225 = arith.constant 3 : index
    %c0_226 = arith.constant 0 : index
    %c0_227 = arith.constant 0 : index
    %483 = vector.load %arg10[%c3_225, %c0_226, %c0_227] : memref<8x8x128xf32, #tpu.memory_space<vmem>>, vector<1x8x128xf32>
    %484 = vector.shape_cast %483 : vector<1x8x128xf32> to vector<8x128xf32>
    %485 = arith.truncf %480 : vector<8x128xf32> to vector<8x128xbf16>
    %cst_228 = arith.constant dense<0.000000e+00> : vector<8x128xf32>
    %486 = tpu.matmul %485, %457, %cst_228 {dimension_numbers = #tpu.dot_dimension_numbers<[1], [0], [0], [1], [0, 0, 1, 1], [], []>} : vector<8x128xbf16>, vector<128x128xbf16>, vector<8x128xf32> -> vector<8x128xf32>
    %487 = arith.addf %484, %486 : vector<8x128xf32>
    %488 = math.tanh %487 : vector<8x128xf32>
    %489 = vector.shape_cast %488 : vector<8x128xf32> to vector<8x1x128xf32>
    %c0_229 = arith.constant 0 : index
    %c3_230 = arith.constant 3 : index
    %c0_231 = arith.constant 0 : index
    %490 = vector.load %arg11[%c0_229, %c3_230, %c0_231] : memref<8x8x128xf32, #tpu.memory_space<vmem>>, vector<8x1x128xf32>
    tpu.vector_store %arg11[%c0_229, %c3_230, %c0_231], %489 {strides = array<i32>} : memref<8x8x128xf32, #tpu.memory_space<vmem>>, vector<8x1x128xf32>,
    %c4_232 = arith.constant 4 : index
    %c0_233 = arith.constant 0 : index
    %c0_234 = arith.constant 0 : index
    %491 = vector.load %arg10[%c4_232, %c0_233, %c0_234] : memref<8x8x128xf32, #tpu.memory_space<vmem>>, vector<1x8x128xf32>
    %492 = vector.shape_cast %491 : vector<1x8x128xf32> to vector<8x128xf32>
    %493 = arith.truncf %488 : vector<8x128xf32> to vector<8x128xbf16>
    %cst_235 = arith.constant dense<0.000000e+00> : vector<8x128xf32>
    %494 = tpu.matmul %493, %457, %cst_235 {dimension_numbers = #tpu.dot_dimension_numbers<[1], [0], [0], [1], [0, 0, 1, 1], [], []>} : vector<8x128xbf16>, vector<128x128xbf16>, vector<8x128xf32> -> vector<8x128xf32>
    %495 = arith.addf %492, %494 : vector<8x128xf32>
    %496 = math.tanh %495 : vector<8x128xf32>
    %497 = vector.shape_cast %496 : vector<8x128xf32> to vector<8x1x128xf32>
    %c0_236 = arith.constant 0 : index
    %c4_237 = arith.constant 4 : index
    %c0_238 = arith.constant 0 : index
    %498 = vector.load %arg11[%c0_236, %c4_237, %c0_238] : memref<8x8x128xf32, #tpu.memory_space<vmem>>, vector<8x1x128xf32>
    tpu.vector_store %arg11[%c0_236, %c4_237, %c0_238], %497 {strides = array<i32>} : memref<8x8x128xf32, #tpu.memory_space<vmem>>, vector<8x1x128xf32>,
    %c5_239 = arith.constant 5 : index
    %c0_240 = arith.constant 0 : index
    %c0_241 = arith.constant 0 : index
    %499 = vector.load %arg10[%c5_239, %c0_240, %c0_241] : memref<8x8x128xf32, #tpu.memory_space<vmem>>, vector<1x8x128xf32>
    %500 = vector.shape_cast %499 : vector<1x8x128xf32> to vector<8x128xf32>
    %501 = arith.truncf %496 : vector<8x128xf32> to vector<8x128xbf16>
    %cst_242 = arith.constant dense<0.000000e+00> : vector<8x128xf32>
    %502 = tpu.matmul %501, %457, %cst_242 {dimension_numbers = #tpu.dot_dimension_numbers<[1], [0], [0], [1], [0, 0, 1, 1], [], []>} : vector<8x128xbf16>, vector<128x128xbf16>, vector<8x128xf32> -> vector<8x128xf32>
    %503 = arith.addf %500, %502 : vector<8x128xf32>
    %504 = math.tanh %503 : vector<8x128xf32>
    %505 = vector.shape_cast %504 : vector<8x128xf32> to vector<8x1x128xf32>
    %c0_243 = arith.constant 0 : index
    %c5_244 = arith.constant 5 : index
    %c0_245 = arith.constant 0 : index
    %506 = vector.load %arg11[%c0_243, %c5_244, %c0_245] : memref<8x8x128xf32, #tpu.memory_space<vmem>>, vector<8x1x128xf32>
    tpu.vector_store %arg11[%c0_243, %c5_244, %c0_245], %505 {strides = array<i32>} : memref<8x8x128xf32, #tpu.memory_space<vmem>>, vector<8x1x128xf32>,
    %c6_246 = arith.constant 6 : index
    %c0_247 = arith.constant 0 : index
    %c0_248 = arith.constant 0 : index
    %507 = vector.load %arg10[%c6_246, %c0_247, %c0_248] : memref<8x8x128xf32, #tpu.memory_space<vmem>>, vector<1x8x128xf32>
    %508 = vector.shape_cast %507 : vector<1x8x128xf32> to vector<8x128xf32>
    %509 = arith.truncf %504 : vector<8x128xf32> to vector<8x128xbf16>
    %cst_249 = arith.constant dense<0.000000e+00> : vector<8x128xf32>
    %510 = tpu.matmul %509, %457, %cst_249 {dimension_numbers = #tpu.dot_dimension_numbers<[1], [0], [0], [1], [0, 0, 1, 1], [], []>} : vector<8x128xbf16>, vector<128x128xbf16>, vector<8x128xf32> -> vector<8x128xf32>
    %511 = arith.addf %508, %510 : vector<8x128xf32>
    %512 = math.tanh %511 : vector<8x128xf32>
    %513 = vector.shape_cast %512 : vector<8x128xf32> to vector<8x1x128xf32>
    %c0_250 = arith.constant 0 : index
    %c6_251 = arith.constant 6 : index
    %c0_252 = arith.constant 0 : index
    %514 = vector.load %arg11[%c0_250, %c6_251, %c0_252] : memref<8x8x128xf32, #tpu.memory_space<vmem>>, vector<8x1x128xf32>
    tpu.vector_store %arg11[%c0_250, %c6_251, %c0_252], %513 {strides = array<i32>} : memref<8x8x128xf32, #tpu.memory_space<vmem>>, vector<8x1x128xf32>,
    %c7_253 = arith.constant 7 : index
    %c0_254 = arith.constant 0 : index
    %c0_255 = arith.constant 0 : index
    %515 = vector.load %arg10[%c7_253, %c0_254, %c0_255] : memref<8x8x128xf32, #tpu.memory_space<vmem>>, vector<1x8x128xf32>
    %516 = vector.shape_cast %515 : vector<1x8x128xf32> to vector<8x128xf32>
    %517 = arith.truncf %512 : vector<8x128xf32> to vector<8x128xbf16>
    %cst_256 = arith.constant dense<0.000000e+00> : vector<8x128xf32>
    %518 = tpu.matmul %517, %457, %cst_256 {dimension_numbers = #tpu.dot_dimension_numbers<[1], [0], [0], [1], [0, 0, 1, 1], [], []>} : vector<8x128xbf16>, vector<128x128xbf16>, vector<8x128xf32> -> vector<8x128xf32>
    %519 = arith.addf %516, %518 : vector<8x128xf32>
    %520 = math.tanh %519 : vector<8x128xf32>
    %521 = vector.shape_cast %520 : vector<8x128xf32> to vector<8x1x128xf32>
    %c0_257 = arith.constant 0 : index
    %c7_258 = arith.constant 7 : index
    %c0_259 = arith.constant 0 : index
    %522 = vector.load %arg11[%c0_257, %c7_258, %c0_259] : memref<8x8x128xf32, #tpu.memory_space<vmem>>, vector<8x1x128xf32>
    tpu.vector_store %arg11[%c0_257, %c7_258, %c0_259], %521 {strides = array<i32>} : memref<8x8x128xf32, #tpu.memory_space<vmem>>, vector<8x1x128xf32>,
    %c0_260 = arith.constant 0 : index
    %c0_261 = arith.constant 0 : index
    %c0_262 = arith.constant 0 : index
    %523 = vector.load %arg11[%c0_260, %c0_261, %c0_262] : memref<8x8x128xf32, #tpu.memory_space<vmem>>, vector<8x8x128xf32>
    %524 = vector.shape_cast %523 : vector<8x8x128xf32> to vector<64x128xf32>
    %525 = arith.truncf %524 : vector<64x128xf32> to vector<64x128xbf16>
    %c0_263 = arith.constant 0 : index
    %c0_264 = arith.constant 0 : index
    %526 = vector.load %arg6[%c0_263, %c0_264] : memref<128x128xbf16, #tpu.memory_space<vmem>>, vector<128x128xbf16>
    %cst_265 = arith.constant dense<0.000000e+00> : vector<64x128xf32>
    %527 = tpu.matmul %525, %526, %cst_265 {dimension_numbers = #tpu.dot_dimension_numbers<[1], [0], [0], [1], [0, 0, 1, 1], [], []>} : vector<64x128xbf16>, vector<128x128xbf16>, vector<64x128xf32> -> vector<64x128xf32>
    %c0_266 = arith.constant 0 : index
    %c0_267 = arith.constant 0 : index
    %528 = vector.load %arg7[%c0_266, %c0_267] : memref<1x128xf32, #tpu.memory_space<vmem>>, vector<1x128xf32>
    %529 = vector.broadcast %528 : vector<1x128xf32> to vector<64x128xf32>
    %530 = arith.addf %527, %529 : vector<64x128xf32>
    %531 = vector.shape_cast %530 : vector<64x128xf32> to vector<8x8x128xf32>
    %c0_268 = arith.constant 0 : index
    %c0_269 = arith.constant 0 : index
    %c0_270 = arith.constant 0 : index
    %532 = vector.load %arg8[%c0_268, %c0_269, %c0_270] : memref<8x8x128xf32, #tpu.memory_space<vmem>>, vector<8x8x128xf32>
    tpu.vector_store %arg8[%c0_268, %c0_269, %c0_270], %531 {strides = array<i32>} : memref<8x8x128xf32, #tpu.memory_space<vmem>>, vector<8x8x128xf32>,
    return
  }
  func.func @transform_0(%arg0: i32, %arg1: memref<64xi32, #tpu.memory_space<smem>>) -> (i32, i32) {
    %c0_i32 = arith.constant 0 : i32
    %c0_i32_0 = arith.constant 0 : i32
    %c0_i32_1 = arith.constant 0 : i32
    return %c0_i32, %c0_i32_0 : i32, i32
  }
  func.func @transform_1(%arg0: i32, %arg1: memref<64xi32, #tpu.memory_space<smem>>) -> (i32, i32) {
    %c0_i32 = arith.constant 0 : i32
    %c0_i32_0 = arith.constant 0 : i32
    %c0_i32_1 = arith.constant 0 : i32
    return %c0_i32, %c0_i32_0 : i32, i32
  }
  func.func @transform_2(%arg0: i32, %arg1: memref<64xi32, #tpu.memory_space<smem>>) -> (i32, i32) {
    %c0_i32 = arith.constant 0 : i32
    %c0_i32_0 = arith.constant 0 : i32
    %c0_i32_1 = arith.constant 0 : i32
    return %c0_i32, %c0_i32_0 : i32, i32
  }
  func.func @transform_3(%arg0: i32, %arg1: memref<64xi32, #tpu.memory_space<smem>>) -> (i32, i32) {
    %c0_i32 = arith.constant 0 : i32
    %c0_i32_0 = arith.constant 0 : i32
    %c0_i32_1 = arith.constant 0 : i32
    return %c0_i32, %c0_i32_0 : i32, i32
  }
  func.func @transform_4(%arg0: i32, %arg1: memref<64xi32, #tpu.memory_space<smem>>) -> (i32, i32) {
    %c0_i32 = arith.constant 0 : i32
    %c0_i32_0 = arith.constant 0 : i32
    %c0_i32_1 = arith.constant 0 : i32
    return %c0_i32, %c0_i32_0 : i32, i32
  }
  func.func @transform_5(%arg0: i32, %arg1: memref<64xi32, #tpu.memory_space<smem>>) -> (i32, i32) {
    %c0_i32 = arith.constant 0 : i32
    %c0_i32_0 = arith.constant 0 : i32
    %c0_i32_1 = arith.constant 0 : i32
    return %c0_i32, %c0_i32_0 : i32, i32
  }
  func.func @transform_6(%arg0: i32, %arg1: memref<64xi32, #tpu.memory_space<smem>>) -> (i32, i32, i32) {
    %c0_i32 = arith.constant 0 : i32
    %c0_i32_0 = arith.constant 0 : i32
    %c0_i32_1 = arith.constant 0 : i32
    %c0_i32_2 = arith.constant 0 : i32
    return %c0_i32, %c0_i32_0, %c0_i32_1 : i32, i32, i32
  }
}

</mosaic_0001>

<llo_original>
// kernel: tpu_custom_call.1
$region0: #{tpu_custom_call.1}
  #allocation0 [shape = 'u32[]', space=smem, size = 0x4, offset = 0x4, fixed_abs, tag = 'smem constant byte address 0x4 - core index']
  #allocation1 [shape = 'u32[144,128]{1,0:T(1,128)}', space=vmem, size = 0x12000, scoped, tag = 'internal scratch']
  #allocation2 [shape = 'f32[64,128]{1,0:T(8,128)}', space=vmem, size = 0x8000, scoped, tag = 'scratch operand']
  #allocation3 [shape = 'f32[8,8,128]{2,1,0:T(8,128)}', space=vmem, size = 0x8000, scoped, tag = 'scratch operand']
  #allocation4 [shape = 'f32[8,8,128]{2,1,0:T(8,128)}', space=vmem, size = 0x8000, scoped, tag = 'scratch operand']
  #allocation5 [shape = 's32[1]{0}', space=sflag, size = 0x4, scoped, tag = 'scoped memory for tpu_custom_call.1']
  #allocation6 [shape = 'u8[512]{0}', space=smem, size = 0x200, scoped, tag = 'prefetched SMEM operand 0']
  %s0 = inlined_call_operand.hbm [shape: s32[64], index: 0, kind: input, shape index: {}]
  %s1 = inlined_call_operand.hbm [shape: f32[128,128], index: 1, kind: input, shape index: {}]
  %s2 = inlined_call_operand.hbm [shape: bf16[128,128], index: 2, kind: input, shape index: {}]
  %s3 = inlined_call_operand.hbm [shape: bf16[128,128], index: 3, kind: input, shape index: {}]
  %s4 = inlined_call_operand.vmem [shape: f32[1,128], index: 4, kind: input, shape index: {}]
  %s5 = inlined_call_operand.hbm [shape: bf16[128,128], index: 5, kind: input, shape index: {}]
  %s6 = inlined_call_operand.vmem [shape: f32[1,128], index: 6, kind: input, shape index: {}]
  %s7 = inlined_call_operand.hbm [shape: f32[8,8,128], index: 7, kind: output, shape index: {}]
  %s8 = sld [smem:[#allocation0]]
  $region50: #{tpu_custom_call.1} parent=0
    _
  %s10 = ssub.s32 1, %s8
  %s11 = scalar_select 0, %s10, %s8
  %13 = dma.hbm_to_smem %s0, 16, [#allocation6], [#allocation5]
  %14 = dma.done [#allocation5], 16
  %15 = sfence
  $region1: #{tpu_custom_call.1} parent=0
    #allocation7 [shape = 'u8[65536]{0}', space=vmem, size = 0x10000, scoped, tag = 'input window, operand 1, single buffered']
    #allocation8 [shape = 's32[1]{0}', space=sflag, size = 0x4, scoped, tag = 'scoped memory for tpu_custom_call.1']
    #allocation9 [shape = 's32[1]{0}', space=sflag, size = 0x4, scoped, tag = 'scoped memory for tpu_custom_call.1']
    #allocation10 [shape = 'u8[32768]{0}', space=vmem, size = 0x8000, scoped, tag = 'input window, operand 2, single buffered']
    #allocation11 [shape = 's32[1]{0}', space=sflag, size = 0x4, scoped, tag = 'scoped memory for tpu_custom_call.1']
    #allocation12 [shape = 'u8[32768]{0}', space=vmem, size = 0x8000, scoped, tag = 'input window, operand 3, single buffered']
    #allocation13 [shape = 'u8[32768]{0}', space=vmem, size = 0x8000, scoped, tag = 'input window, operand 5, single buffered']
    #allocation14 [shape = 's32[1]{0}', space=sflag, size = 0x4, scoped, tag = 'scoped memory for tpu_custom_call.1']
    #allocation15 [shape = 'u8[32768]{0}', space=vmem, size = 0x8000, scoped, tag = 'output window, operand 0, single buffered']
    %16 = vsyncpa [#allocation8], 0
    %17 = vsyncpa [#allocation11], 0
    %18 = vsyncpa [#allocation14], 0
    %19 = vsyncpa [#allocation9], 0
    // Predicated region
    $region2: #{tpu_custom_call.1} parent=1 // pred_check
      _
    $region3: #{tpu_custom_call.1} parent=1 // pred_check_branch
      %21 = sbr.rel (0) target = $region5
    $region4: #{tpu_custom_call.1} parent=1 // pred_region
      %s23 = ssub.s32 2048, 2048
      %24 = vsyncadd [#allocation8], %s23
      %s25 = sshll.u32 [#allocation7], 4
      %s26 = int_to_ptr.vmem [resolvable:$true] %s25
      %31 = dma.hbm_to_vmem [thread:$0]  %s1, 2048, %s26, [#allocation8], 128, 128, 8
    $region5: #{tpu_custom_call.1} parent=1 // pred_fallthru
      _
    // Predicated region
    $region6: #{tpu_custom_call.1} parent=1 // pred_check
      _
    $region7: #{tpu_custom_call.1} parent=1 // pred_check_branch
      %33 = sbr.rel (0) target = $region9
    $region8: #{tpu_custom_call.1} parent=1 // pred_region
      %s35 = ssub.s32 1024, 1024
      %36 = vsyncadd [#allocation11], %s35
      %s37 = sshll.u32 [#allocation10], 4
      %s38 = int_to_ptr.vmem [resolvable:$true] %s37
      %43 = dma.hbm_to_vmem [thread:$0]  %s2, 1024, %s38, [#allocation11], 64, 64, 4
    $region9: #{tpu_custom_call.1} parent=1 // pred_fallthru
      _
    // Predicated region
    $region10: #{tpu_custom_call.1} parent=1 // pred_check
      _
    $region11: #{tpu_custom_call.1} parent=1 // pred_check_branch
      %45 = sbr.rel (0) target = $region13
    $region12: #{tpu_custom_call.1} parent=1 // pred_region
      %s47 = ssub.s32 1024, 1024
      %48 = vsyncadd [#allocation11], %s47
      %s49 = sshll.u32 [#allocation12], 4
      %s50 = int_to_ptr.vmem [resolvable:$true] %s49
      %55 = dma.hbm_to_vmem [thread:$0]  %s3, 1024, %s50, [#allocation11], 64, 64, 4
    $region13: #{tpu_custom_call.1} parent=1 // pred_fallthru
      _
    // Predicated region
    $region14: #{tpu_custom_call.1} parent=1 // pred_check
      _
    $region15: #{tpu_custom_call.1} parent=1 // pred_check_branch
      %57 = sbr.rel (0) target = $region17
    $region16: #{tpu_custom_call.1} parent=1 // pred_region
      _
    $region17: #{tpu_custom_call.1} parent=1 // pred_fallthru
      _
    // Predicated region
    $region18: #{tpu_custom_call.1} parent=1 // pred_check
      _
    $region19: #{tpu_custom_call.1} parent=1 // pred_check_branch
      %59 = sbr.rel (0) target = $region21
    $region20: #{tpu_custom_call.1} parent=1 // pred_region
      %s61 = ssub.s32 1024, 1024
      %62 = vsyncadd [#allocation14], %s61
      %s63 = sshll.u32 [#allocation13], 4
      %s64 = int_to_ptr.vmem [resolvable:$true] %s63
      %69 = dma.hbm_to_vmem [thread:$0]  %s5, 1024, %s64, [#allocation14], 64, 64, 4
    $region21: #{tpu_custom_call.1} parent=1 // pred_fallthru
      _
    // Predicated region
    $region22: #{tpu_custom_call.1} parent=1 // pred_check
      _
    $region23: #{tpu_custom_call.1} parent=1 // pred_check_branch
      %71 = sbr.rel (0) target = $region25
    $region24: #{tpu_custom_call.1} parent=1 // pred_region
      _
    $region25: #{tpu_custom_call.1} parent=1 // pred_fallthru
      _
    // Predicated region
    $region26: #{tpu_custom_call.1} parent=1 // pred_check
      _
    $region27: #{tpu_custom_call.1} parent=1 // pred_check_branch
      %73 = sbr.rel (0) target = $region29
    $region28: #{tpu_custom_call.1} parent=1 // pred_region
      %74 = dma.done [#allocation8], 2048
    $region29: #{tpu_custom_call.1} parent=1 // pred_fallthru
      _
    // Predicated region
    $region30: #{tpu_custom_call.1} parent=1 // pred_check
      _
    $region31: #{tpu_custom_call.1} parent=1 // pred_check_branch
      %76 = sbr.rel (0) target = $region33
    $region32: #{tpu_custom_call.1} parent=1 // pred_region
      %77 = dma.done [#allocation11], 1024
    $region33: #{tpu_custom_call.1} parent=1 // pred_fallthru
      _
    // Predicated region
    $region34: #{tpu_custom_call.1} parent=1 // pred_check
      _
    $region35: #{tpu_custom_call.1} parent=1 // pred_check_branch
      %79 = sbr.rel (0) target = $region37
    $region36: #{tpu_custom_call.1} parent=1 // pred_region
      %80 = dma.done [#allocation11], 1024
    $region37: #{tpu_custom_call.1} parent=1 // pred_fallthru
      _
    // Predicated region
    $region38: #{tpu_custom_call.1} parent=1 // pred_check
      _
    $region39: #{tpu_custom_call.1} parent=1 // pred_check_branch
      %82 = sbr.rel (0) target = $region41
    $region40: #{tpu_custom_call.1} parent=1 // pred_region
      %83 = dma.done [#allocation14], 1024
    $region41: #{tpu_custom_call.1} parent=1 // pred_fallthru
      _
    %s85 = sld [smem:[#allocation6]]
    %s86 = scalar_lea.vmem [#allocation7], %s85
    %v87 = vld [vmem:[%s86] sm:$0x1]
    %88 = vst [vmem:[#allocation2] sm:$0x1] %v87
    %s89 = sld [smem:[#allocation6 + $0x1]]
    %s90 = scalar_lea.vmem [#allocation7], %s89
    %v91 = vld [vmem:[%s90] sm:$0x1]
    %92 = vst [vmem:[#allocation2 + $0x1] sm:$0x1] %v91
    %s93 = sld [smem:[#allocation6 + $0x2]]
    %s94 = scalar_lea.vmem [#allocation7], %s93
    %v95 = vld [vmem:[%s94] sm:$0x1]
    %96 = vst [vmem:[#allocation2 + $0x2] sm:$0x1] %v95
    %s97 = sld [smem:[#allocation6 + $0x3]]
    %s98 = scalar_lea.vmem [#allocation7], %s97
    %v99 = vld [vmem:[%s98] sm:$0x1]
    %100 = vst [vmem:[#allocation2 + $0x3] sm:$0x1] %v99
    %s101 = sld [smem:[#allocation6 + $0x4]]
    %s102 = scalar_lea.vmem [#allocation7], %s101
    %v103 = vld [vmem:[%s102] sm:$0x1]
    %104 = vst [vmem:[#allocation2 + $0x4] sm:$0x1] %v103
    %s105 = sld [smem:[#allocation6 + $0x5]]
    %s106 = scalar_lea.vmem [#allocation7], %s105
    %v107 = vld [vmem:[%s106] sm:$0x1]
    %108 = vst [vmem:[#allocation2 + $0x5] sm:$0x1] %v107
    %s109 = sld [smem:[#allocation6 + $0x6]]
    %s110 = scalar_lea.vmem [#allocation7], %s109
    %v111 = vld [vmem:[%s110] sm:$0x1]
    %112 = vst [vmem:[#allocation2 + $0x6] sm:$0x1] %v111
    %s113 = sld [smem:[#allocation6 + $0x7]]
    %s114 = scalar_lea.vmem [#allocation7], %s113
    %v115 = vld [vmem:[%s114] sm:$0x1]
    %116 = vst [vmem:[#allocation2 + $0x7] sm:$0x1] %v115
    %s117 = sld [smem:[#allocation6 + $0x8]]
    %s118 = scalar_lea.vmem [#allocation7], %s117
    %v119 = vld [vmem:[%s118] sm:$0x1]
    %120 = vst [vmem:[#allocation2 + $0x8] sm:$0x1] %v119
    %s121 = sld [smem:[#allocation6 + $0x9]]
    %s122 = scalar_lea.vmem [#allocation7], %s121
    %v123 = vld [vmem:[%s122] sm:$0x1]
    %124 = vst [vmem:[#allocation2 + $0x9] sm:$0x1] %v123
    %s125 = sld [smem:[#allocation6 + $0xa]]
    %s126 = scalar_lea.vmem [#allocation7], %s125
    %v127 = vld [vmem:[%s126] sm:$0x1]
    %128 = vst [vmem:[#allocation2 + $0xa] sm:$0x1] %v127
    %s129 = sld [smem:[#allocation6 + $0xb]]
    %s130 = scalar_lea.vmem [#allocation7], %s129
    %v131 = vld [vmem:[%s130] sm:$0x1]
    %132 = vst [vmem:[#allocation2 + $0xb] sm:$0x1] %v131
    %s133 = sld [smem:[#allocation6 + $0xc]]
    %s134 = scalar_lea.vmem [#allocation7], %s133
    %v135 = vld [vmem:[%s134] sm:$0x1]
    %136 = vst [vmem:[#allocation2 + $0xc] sm:$0x1] %v135
    %s137 = sld [smem:[#allocation6 + $0xd]]
    %s138 = scalar_lea.vmem [#allocation7], %s137
    %v139 = vld [vmem:[%s138] sm:$0x1]
    %140 = vst [vmem:[#allocation2 + $0xd] sm:$0x1] %v139
    %s141 = sld [smem:[#allocation6 + $0xe]]
    %s142 = scalar_lea.vmem [#allocation7], %s141
    %v143 = vld [vmem:[%s142] sm:$0x1]
    %144 = vst [vmem:[#allocation2 + $0xe] sm:$0x1] %v143
    %s145 = sld [smem:[#allocation6 + $0xf]]
    %s146 = scalar_lea.vmem [#allocation7], %s145
    %v147 = vld [vmem:[%s146] sm:$0x1]
    %148 = vst [vmem:[#allocation2 + $0xf] sm:$0x1] %v147
    %s149 = sld [smem:[#allocation6 + $0x10]]
    %s150 = scalar_lea.vmem [#allocation7], %s149
    %v151 = vld [vmem:[%s150] sm:$0x1]
    %152 = vst [vmem:[#allocation2 + $0x10] sm:$0x1] %v151
    %s153 = sld [smem:[#allocation6 + $0x11]]
    %s154 = scalar_lea.vmem [#allocation7], %s153
    %v155 = vld [vmem:[%s154] sm:$0x1]
    %156 = vst [vmem:[#allocation2 + $0x11] sm:$0x1] %v155
    %s157 = sld [smem:[#allocation6 + $0x12]]
    %s158 = scalar_lea.vmem [#allocation7], %s157
    %v159 = vld [vmem:[%s158] sm:$0x1]
    %160 = vst [vmem:[#allocation2 + $0x12] sm:$0x1] %v159
    %s161 = sld [smem:[#allocation6 + $0x13]]
    %s162 = scalar_lea.vmem [#allocation7], %s161
    %v163 = vld [vmem:[%s162] sm:$0x1]
    %164 = vst [vmem:[#allocation2 + $0x13] sm:$0x1] %v163
    %s165 = sld [smem:[#allocation6 + $0x14]]
    %s166 = scalar_lea.vmem [#allocation7], %s165
    %v167 = vld [vmem:[%s166] sm:$0x1]
    %168 = vst [vmem:[#allocation2 + $0x14] sm:$0x1] %v167
    %s169 = sld [smem:[#allocation6 + $0x15]]
    %s170 = scalar_lea.vmem [#allocation7], %s169
    %v171 = vld [vmem:[%s170] sm:$0x1]
    %172 = vst [vmem:[#allocation2 + $0x15] sm:$0x1] %v171
    %s173 = sld [smem:[#allocation6 + $0x16]]
    %s174 = scalar_lea.vmem [#allocation7], %s173
    %v175 = vld [vmem:[%s174] sm:$0x1]
    %176 = vst [vmem:[#allocation2 + $0x16] sm:$0x1] %v175
    %s177 = sld [smem:[#allocation6 + $0x17]]
    %s178 = scalar_lea.vmem [#allocation7], %s177
    %v179 = vld [vmem:[%s178] sm:$0x1]
    %180 = vst [vmem:[#allocation2 + $0x17] sm:$0x1] %v179
    %s181 = sld [smem:[#allocation6 + $0x18]]
    %s182 = scalar_lea.vmem [#allocation7], %s181
    %v183 = vld [vmem:[%s182] sm:$0x1]
    %184 = vst [vmem:[#allocation2 + $0x18] sm:$0x1] %v183
    %s185 = sld [smem:[#allocation6 + $0x19]]
    %s186 = scalar_lea.vmem [#allocation7], %s185
    %v187 = vld [vmem:[%s186] sm:$0x1]
    %188 = vst [vmem:[#allocation2 + $0x19] sm:$0x1] %v187
    %s189 = sld [smem:[#allocation6 + $0x1a]]
    %s190 = scalar_lea.vmem [#allocation7], %s189
    %v191 = vld [vmem:[%s190] sm:$0x1]
    %192 = vst [vmem:[#allocation2 + $0x1a] sm:$0x1] %v191
    %s193 = sld [smem:[#allocation6 + $0x1b]]
    %s194 = scalar_lea.vmem [#allocation7], %s193
    %v195 = vld [vmem:[%s194] sm:$0x1]
    %196 = vst [vmem:[#allocation2 + $0x1b] sm:$0x1] %v195
    %s197 = sld [smem:[#allocation6 + $0x1c]]
    %s198 = scalar_lea.vmem [#allocation7], %s197
    %v199 = vld [vmem:[%s198] sm:$0x1]
    %200 = vst [vmem:[#allocation2 + $0x1c] sm:$0x1] %v199
    %s201 = sld [smem:[#allocation6 + $0x1d]]
    %s202 = scalar_lea.vmem [#allocation7], %s201
    %v203 = vld [vmem:[%s202] sm:$0x1]
    %204 = vst [vmem:[#allocation2 + $0x1d] sm:$0x1] %v203
    %s205 = sld [smem:[#allocation6 + $0x1e]]
    %s206 = scalar_lea.vmem [#allocation7], %s205
    %v207 = vld [vmem:[%s206] sm:$0x1]
    %208 = vst [vmem:[#allocation2 + $0x1e] sm:$0x1] %v207
    %s209 = sld [smem:[#allocation6 + $0x1f]]
    %s210 = scalar_lea.vmem [#allocation7], %s209
    %v211 = vld [vmem:[%s210] sm:$0x1]
    %212 = vst [vmem:[#allocation2 + $0x1f] sm:$0x1] %v211
    %s213 = sld [smem:[#allocation6 + $0x20]]
    %s214 = scalar_lea.vmem [#allocation7], %s213
    %v215 = vld [vmem:[%s214] sm:$0x1]
    %216 = vst [vmem:[#allocation2 + $0x20] sm:$0x1] %v215
    %s217 = sld [smem:[#allocation6 + $0x21]]
    %s218 = scalar_lea.vmem [#allocation7], %s217
    %v219 = vld [vmem:[%s218] sm:$0x1]
    %220 = vst [vmem:[#allocation2 + $0x21] sm:$0x1] %v219
    %s221 = sld [smem:[#allocation6 + $0x22]]
    %s222 = scalar_lea.vmem [#allocation7], %s221
    %v223 = vld [vmem:[%s222] sm:$0x1]
    %224 = vst [vmem:[#allocation2 + $0x22] sm:$0x1] %v223
    %s225 = sld [smem:[#allocation6 + $0x23]]
    %s226 = scalar_lea.vmem [#allocation7], %s225
    %v227 = vld [vmem:[%s226] sm:$0x1]
    %228 = vst [vmem:[#allocation2 + $0x23] sm:$0x1] %v227
    %s229 = sld [smem:[#allocation6 + $0x24]]
    %s230 = scalar_lea.vmem [#allocation7], %s229
    %v231 = vld [vmem:[%s230] sm:$0x1]
    %232 = vst [vmem:[#allocation2 + $0x24] sm:$0x1] %v231
    %s233 = sld [smem:[#allocation6 + $0x25]]
    %s234 = scalar_lea.vmem [#allocation7], %s233
    %v235 = vld [vmem:[%s234] sm:$0x1]
    %236 = vst [vmem:[#allocation2 + $0x25] sm:$0x1] %v235
    %s237 = sld [smem:[#allocation6 + $0x26]]
    %s238 = scalar_lea.vmem [#allocation7], %s237
    %v239 = vld [vmem:[%s238] sm:$0x1]
    %240 = vst [vmem:[#allocation2 + $0x26] sm:$0x1] %v239
    %s241 = sld [smem:[#allocation6 + $0x27]]
    %s242 = scalar_lea.vmem [#allocation7], %s241
    %v243 = vld [vmem:[%s242] sm:$0x1]
    %244 = vst [vmem:[#allocation2 + $0x27] sm:$0x1] %v243
    %s245 = sld [smem:[#allocation6 + $0x28]]
    %s246 = scalar_lea.vmem [#allocation7], %s245
    %v247 = vld [vmem:[%s246] sm:$0x1]
    %248 = vst [vmem:[#allocation2 + $0x28] sm:$0x1] %v247
    %s249 = sld [smem:[#allocation6 + $0x29]]
    %s250 = scalar_lea.vmem [#allocation7], %s249
    %v251 = vld [vmem:[%s250] sm:$0x1]
    %252 = vst [vmem:[#allocation2 + $0x29] sm:$0x1] %v251
    %s253 = sld [smem:[#allocation6 + $0x2a]]
    %s254 = scalar_lea.vmem [#allocation7], %s253
    %v255 = vld [vmem:[%s254] sm:$0x1]
    %256 = vst [vmem:[#allocation2 + $0x2a] sm:$0x1] %v255
    %s257 = sld [smem:[#allocation6 + $0x2b]]
    %s258 = scalar_lea.vmem [#allocation7], %s257
    %v259 = vld [vmem:[%s258] sm:$0x1]
    %260 = vst [vmem:[#allocation2 + $0x2b] sm:$0x1] %v259
    %s261 = sld [smem:[#allocation6 + $0x2c]]
    %s262 = scalar_lea.vmem [#allocation7], %s261
    %v263 = vld [vmem:[%s262] sm:$0x1]
    %264 = vst [vmem:[#allocation2 + $0x2c] sm:$0x1] %v263
    %s265 = sld [smem:[#allocation6 + $0x2d]]
    %s266 = scalar_lea.vmem [#allocation7], %s265
    %v267 = vld [vmem:[%s266] sm:$0x1]
    %268 = vst [vmem:[#allocation2 + $0x2d] sm:$0x1] %v267
    %s269 = sld [smem:[#allocation6 + $0x2e]]
    %s270 = scalar_lea.vmem [#allocation7], %s269
    %v271 = vld [vmem:[%s270] sm:$0x1]
    %272 = vst [vmem:[#allocation2 + $0x2e] sm:$0x1] %v271
    %s273 = sld [smem:[#allocation6 + $0x2f]]
    %s274 = scalar_lea.vmem [#allocation7], %s273
    %v275 = vld [vmem:[%s274] sm:$0x1]
    %276 = vst [vmem:[#allocation2 + $0x2f] sm:$0x1] %v275
    %s277 = sld [smem:[#allocation6 + $0x30]]
    %s278 = scalar_lea.vmem [#allocation7], %s277
    %v279 = vld [vmem:[%s278] sm:$0x1]
    %280 = vst [vmem:[#allocation2 + $0x30] sm:$0x1] %v279
    %s281 = sld [smem:[#allocation6 + $0x31]]
    %s282 = scalar_lea.vmem [#allocation7], %s281
    %v283 = vld [vmem:[%s282] sm:$0x1]
    %284 = vst [vmem:[#allocation2 + $0x31] sm:$0x1] %v283
    %s285 = sld [smem:[#allocation6 + $0x32]]
    %s286 = scalar_lea.vmem [#allocation7], %s285
    %v287 = vld [vmem:[%s286] sm:$0x1]
    %288 = vst [vmem:[#allocation2 + $0x32] sm:$0x1] %v287
    %s289 = sld [smem:[#allocation6 + $0x33]]
    %s290 = scalar_lea.vmem [#allocation7], %s289
    %v291 = vld [vmem:[%s290] sm:$0x1]
    %292 = vst [vmem:[#allocation2 + $0x33] sm:$0x1] %v291
    %s293 = sld [smem:[#allocation6 + $0x34]]
    %s294 = scalar_lea.vmem [#allocation7], %s293
    %v295 = vld [vmem:[%s294] sm:$0x1]
    %296 = vst [vmem:[#allocation2 + $0x34] sm:$0x1] %v295
    %s297 = sld [smem:[#allocation6 + $0x35]]
    %s298 = scalar_lea.vmem [#allocation7], %s297
    %v299 = vld [vmem:[%s298] sm:$0x1]
    %300 = vst [vmem:[#allocation2 + $0x35] sm:$0x1] %v299
    %s301 = sld [smem:[#allocation6 + $0x36]]
    %s302 = scalar_lea.vmem [#allocation7], %s301
    %v303 = vld [vmem:[%s302] sm:$0x1]
    %304 = vst [vmem:[#allocation2 + $0x36] sm:$0x1] %v303
    %s305 = sld [smem:[#allocation6 + $0x37]]
    %s306 = scalar_lea.vmem [#allocation7], %s305
    %v307 = vld [vmem:[%s306] sm:$0x1]
    %308 = vst [vmem:[#allocation2 + $0x37] sm:$0x1] %v307
    %s309 = sld [smem:[#allocation6 + $0x38]]
    %s310 = scalar_lea.vmem [#allocation7], %s309
    %v311 = vld [vmem:[%s310] sm:$0x1]
    %312 = vst [vmem:[#allocation2 + $0x38] sm:$0x1] %v311
    %s313 = sld [smem:[#allocation6 + $0x39]]
    %s314 = scalar_lea.vmem [#allocation7], %s313
    %v315 = vld [vmem:[%s314] sm:$0x1]
    %316 = vst [vmem:[#allocation2 + $0x39] sm:$0x1] %v315
    %s317 = sld [smem:[#allocation6 + $0x3a]]
    %s318 = scalar_lea.vmem [#allocation7], %s317
    %v319 = vld [vmem:[%s318] sm:$0x1]
    %320 = vst [vmem:[#allocation2 + $0x3a] sm:$0x1] %v319
    %s321 = sld [smem:[#allocation6 + $0x3b]]
    %s322 = scalar_lea.vmem [#allocation7], %s321
    %v323 = vld [vmem:[%s322] sm:$0x1]
    %324 = vst [vmem:[#allocation2 + $0x3b] sm:$0x1] %v323
    %s325 = sld [smem:[#allocation6 + $0x3c]]
    %s326 = scalar_lea.vmem [#allocation7], %s325
    %v327 = vld [vmem:[%s326] sm:$0x1]
    %328 = vst [vmem:[#allocation2 + $0x3c] sm:$0x1] %v327
    %s329 = sld [smem:[#allocation6 + $0x3d]]
    %s330 = scalar_lea.vmem [#allocation7], %s329
    %v331 = vld [vmem:[%s330] sm:$0x1]
    %332 = vst [vmem:[#allocation2 + $0x3d] sm:$0x1] %v331
    %s333 = sld [smem:[#allocation6 + $0x3e]]
    %s334 = scalar_lea.vmem [#allocation7], %s333
    %v335 = vld [vmem:[%s334] sm:$0x1]
    %336 = vst [vmem:[#allocation2 + $0x3e] sm:$0x1] %v335
    %s337 = sld [smem:[#allocation6 + $0x3f]]
    %s338 = scalar_lea.vmem [#allocation7], %s337
    %v339 = vld [vmem:[%s338] sm:$0x1]
    %340 = vst [vmem:[#allocation2 + $0x3f] sm:$0x1] %v339
    %v341 = vld [vmem:[#allocation2] sm:$0xff]
    %v342 = vld [vmem:[#allocation2 + $0x8] sm:$0xff]
    %v343 = vld [vmem:[#allocation2 + $0x10] sm:$0xff]
    %v344 = vld [vmem:[#allocation2 + $0x18] sm:$0xff]
    %v345 = vld [vmem:[#allocation2 + $0x20] sm:$0xff]
    %v346 = vld [vmem:[#allocation2 + $0x28] sm:$0xff]
    %v347 = vld [vmem:[#allocation2 + $0x30] sm:$0xff]
    %v348 = vld [vmem:[#allocation2 + $0x38] sm:$0xff]
    %v349 = vpack.c.bf16 %v342, %v341
    %v350 = vpack.c.bf16 %v344, %v343
    %v351 = vpack.c.bf16 %v346, %v345
    %v352 = vpack.c.bf16 %v348, %v347
    %v353 = vld [vmem:[#allocation10] sm:$0xf]
    %v354 = vld [vmem:[#allocation10 + $0x4] sm:$0xf]
    %v355 = vld [vmem:[#allocation10 + $0x8] sm:$0xf]
    %v356 = vld [vmem:[#allocation10 + $0xc] sm:$0xf]
    %v357 = vld [vmem:[#allocation10 + $0x10] sm:$0xf]
    %v358 = vld [vmem:[#allocation10 + $0x14] sm:$0xf]
    %v359 = vld [vmem:[#allocation10 + $0x18] sm:$0xf]
    %v360 = vld [vmem:[#allocation10 + $0x1c] sm:$0xf]
    %v361 = vld [vmem:[#allocation10 + $0x20] sm:$0xf]
    %v362 = vld [vmem:[#allocation10 + $0x24] sm:$0xf]
    %v363 = vld [vmem:[#allocation10 + $0x28] sm:$0xf]
    %v364 = vld [vmem:[#allocation10 + $0x2c] sm:$0xf]
    %v365 = vld [vmem:[#allocation10 + $0x30] sm:$0xf]
    %v366 = vld [vmem:[#allocation10 + $0x34] sm:$0xf]
    %v367 = vld [vmem:[#allocation10 + $0x38] sm:$0xf]
    %v368 = vld [vmem:[#allocation10 + $0x3c] sm:$0xf]
    %v369 = vld [vmem:[%s4] sm:$0x1]
    %v371 = vlaneseq
    %v372 = vshrl.u32 %v371, 7
    %v373 = vsub.s32 0, %v372
    %v374 = vrot.slane %v369, %v373
    %v392 = vunpack.c.l.b16 %v353
    %v393 = vunpack.c.l.b16 %v354
    %v394 = vunpack.c.l.b16 %v355
    %v395 = vunpack.c.l.b16 %v356
    %v396 = vunpack.c.l.b16 %v357
    %v397 = vunpack.c.l.b16 %v358
    %v398 = vunpack.c.l.b16 %v359
    %v399 = vunpack.c.l.b16 %v360
    %v400 = vunpack.c.l.b16 %v361
    %v401 = vunpack.c.l.b16 %v362
    %v402 = vunpack.c.l.b16 %v363
    %v403 = vunpack.c.l.b16 %v364
    %v404 = vunpack.c.l.b16 %v365
    %v405 = vunpack.c.l.b16 %v366
    %v406 = vunpack.c.l.b16 %v367
    %v407 = vunpack.c.l.b16 %v368
    %v408 = vpack.c.b16 %v393, %v392
    %v409 = vpack.c.b16 %v395, %v394
    %v410 = vpack.c.b16 %v397, %v396
    %v411 = vpack.c.b16 %v399, %v398
    %v412 = vpack.c.b16 %v401, %v400
    %v413 = vpack.c.b16 %v403, %v402
    %v414 = vpack.c.b16 %v405, %v404
    %v415 = vpack.c.b16 %v407, %v406
    %424 = vmatprep.subr.bf16.mxu0 0
    %425 = vmatpush1.bf16.msra.mxu0 %v415
    %426 = vmatprep.subr.bf16.mxu0 0
    %427 = vmatpush1.bf16.msra.mxu0 %v414
    %428 = vmatprep.subr.bf16.mxu0 0
    %429 = vmatpush1.bf16.msra.mxu0 %v413
    %430 = vmatprep.subr.bf16.mxu0 0
    %431 = vmatpush1.bf16.msra.mxu0 %v412
    %432 = vmatprep.subr.bf16.mxu0 0
    %433 = vmatpush1.bf16.msra.mxu0 %v411
    %434 = vmatprep.subr.bf16.mxu0 0
    %435 = vmatpush1.bf16.msra.mxu0 %v410
    %436 = vmatprep.subr.bf16.mxu0 0
    %437 = vmatpush1.bf16.msra.mxu0 %v409
    %438 = vmatprep.subr.bf16.mxu0 0
    %439 = vmatpush1.bf16.msra.mxu0 %v408
    %440 = vmatprep.subr.bf16.mxu0 0
    %441 = vmatpush2.bf16.msra.mxu0 0
    %442 = vmatprep.subr.bf16.mxu0 0
    %443 = vmatpush2.bf16.msra.mxu0 0
    %444 = vmatprep.subr.bf16.mxu0 0
    %445 = vmatpush2.bf16.msra.mxu0 0
    %446 = vmatprep.subr.bf16.mxu0 0
    %447 = vmatpush2.bf16.msra.mxu0 0
    %448 = vmatprep.subr.bf16.mxu0 0
    %449 = vmatpush2.bf16.msra.mxu0 0
    %450 = vmatprep.subr.bf16.mxu0 0
    %451 = vmatpush2.bf16.msra.mxu0 0
    %452 = vmatprep.subr.bf16.mxu0 0
    %453 = vmatpush2.bf16.msra.mxu0 0
    %454 = vmatprep.subr.bf16.mxu0 0
    %455 = vmatpush2.bf16.msra.mxu0 0
    %456 = vmatprep.mubr.bf16.mxu0 0
    %457 = vmatmul.mubr.bf16.gmra.mxu0 %v349
    %v458 = vpop.f32.mrf.mxu0
    %v459 = vadd.f32 %v374, %v458
    %v460 = vpop.f32.mrf.mxu0
    %v461 = vpop.f32.mrf.mxu0
    %v462 = vadd.f32 %v374, %v461
    %v463 = vpop.f32.mrf.mxu0
    %464 = vmatprep.mubr.bf16.mxu0 0
    %465 = vmatmul.mubr.bf16.gmra.mxu0 %v350
    %v466 = vpop.f32.mrf.mxu0
    %v467 = vadd.f32 %v374, %v466
    %v468 = vpop.f32.mrf.mxu0
    %v469 = vpop.f32.mrf.mxu0
    %v470 = vadd.f32 %v374, %v469
    %v471 = vpop.f32.mrf.mxu0
    %472 = vmatprep.mubr.bf16.mxu0 0
    %473 = vmatmul.mubr.bf16.gmra.mxu0 %v351
    %v474 = vpop.f32.mrf.mxu0
    %v475 = vadd.f32 %v374, %v474
    %v476 = vpop.f32.mrf.mxu0
    %v477 = vpop.f32.mrf.mxu0
    %v478 = vadd.f32 %v374, %v477
    %v479 = vpop.f32.mrf.mxu0
    %480 = vmatprep.mubr.bf16.mxu0 0
    %481 = vmatmul.mubr.bf16.gmra.mxu0 %v352
    %v482 = vpop.f32.mrf.mxu0
    %v483 = vadd.f32 %v374, %v482
    %v484 = vpop.f32.mrf.mxu0
    %v485 = vpop.f32.mrf.mxu0
    %v486 = vadd.f32 %v374, %v485
    %v487 = vpop.f32.mrf.mxu0
    %488 = vdwg.mxu0
    %489 = vst [vmem:[#allocation3] sm:$0xff] %v459
    %490 = vst [vmem:[#allocation3 + $0x8] sm:$0xff] %v462
    %491 = vst [vmem:[#allocation3 + $0x10] sm:$0xff] %v467
    %492 = vst [vmem:[#allocation3 + $0x18] sm:$0xff] %v470
    %493 = vst [vmem:[#allocation3 + $0x20] sm:$0xff] %v475
    %494 = vst [vmem:[#allocation3 + $0x28] sm:$0xff] %v478
    %495 = vst [vmem:[#allocation3 + $0x30] sm:$0xff] %v483
    %496 = vst [vmem:[#allocation3 + $0x38] sm:$0xff] %v486
    %v497 = vld [vmem:[#allocation12] sm:$0xf]
    %v498 = vld [vmem:[#allocation12 + $0x4] sm:$0xf]
    %v499 = vld [vmem:[#allocation12 + $0x8] sm:$0xf]
    %v500 = vld [vmem:[#allocation12 + $0xc] sm:$0xf]
    %v501 = vld [vmem:[#allocation12 + $0x10] sm:$0xf]
    %v502 = vld [vmem:[#allocation12 + $0x14] sm:$0xf]
    %v503 = vld [vmem:[#allocation12 + $0x18] sm:$0xf]
    %v504 = vld [vmem:[#allocation12 + $0x1c] sm:$0xf]
    %v505 = vld [vmem:[#allocation12 + $0x20] sm:$0xf]
    %v506 = vld [vmem:[#allocation12 + $0x24] sm:$0xf]
    %v507 = vld [vmem:[#allocation12 + $0x28] sm:$0xf]
    %v508 = vld [vmem:[#allocation12 + $0x2c] sm:$0xf]
    %v509 = vld [vmem:[#allocation12 + $0x30] sm:$0xf]
    %v510 = vld [vmem:[#allocation12 + $0x34] sm:$0xf]
    %v511 = vld [vmem:[#allocation12 + $0x38] sm:$0xf]
    %v512 = vld [vmem:[#allocation12 + $0x3c] sm:$0xf]
    %v513 = vld [vmem:[#allocation3] sm:$0xff]
    %v530 = vunpack.c.l.b16 %v497
    %v531 = vunpack.c.l.b16 %v498
    %v532 = vunpack.c.l.b16 %v499
    %v533 = vunpack.c.l.b16 %v500
    %v534 = vunpack.c.l.b16 %v501
    %v535 = vunpack.c.l.b16 %v502
    %v536 = vunpack.c.l.b16 %v503
    %v537 = vunpack.c.l.b16 %v504
    %v538 = vunpack.c.l.b16 %v505
    %v539 = vunpack.c.l.b16 %v506
    %v540 = vunpack.c.l.b16 %v507
    %v541 = vunpack.c.l.b16 %v508
    %v542 = vunpack.c.l.b16 %v509
    %v543 = vunpack.c.l.b16 %v510
    %v544 = vunpack.c.l.b16 %v511
    %v545 = vunpack.c.l.b16 %v512
    %v546 = vpack.c.b16 %v531, %v530
    %v547 = vpack.c.b16 %v533, %v532
    %v548 = vpack.c.b16 %v535, %v534
    %v549 = vpack.c.b16 %v537, %v536
    %v550 = vpack.c.b16 %v539, %v538
    %v551 = vpack.c.b16 %v541, %v540
    %v552 = vpack.c.b16 %v543, %v542
    %v553 = vpack.c.b16 %v545, %v544
    %562 = vmatprep.subr.bf16.mxu0 0
    %563 = vmatpush1.bf16.msra.mxu0 %v553
    %564 = vmatprep.subr.bf16.mxu0 0
    %565 = vmatpush1.bf16.msra.mxu0 %v552
    %566 = vmatprep.subr.bf16.mxu0 0
    %567 = vmatpush1.bf16.msra.mxu0 %v551
    %568 = vmatprep.subr.bf16.mxu0 0
    %569 = vmatpush1.bf16.msra.mxu0 %v550
    %570 = vmatprep.subr.bf16.mxu0 0
    %571 = vmatpush1.bf16.msra.mxu0 %v549
    %572 = vmatprep.subr.bf16.mxu0 0
    %573 = vmatpush1.bf16.msra.mxu0 %v548
    %574 = vmatprep.subr.bf16.mxu0 0
    %575 = vmatpush1.bf16.msra.mxu0 %v547
    %576 = vmatprep.subr.bf16.mxu0 0
    %577 = vmatpush1.bf16.msra.mxu0 %v546
    %578 = vmatprep.subr.bf16.mxu0 0
    %579 = vmatpush2.bf16.msra.mxu0 0
    %580 = vmatprep.subr.bf16.mxu0 0
    %581 = vmatpush2.bf16.msra.mxu0 0
    %582 = vmatprep.subr.bf16.mxu0 0
    %583 = vmatpush2.bf16.msra.mxu0 0
    %584 = vmatprep.subr.bf16.mxu0 0
    %585 = vmatpush2.bf16.msra.mxu0 0
    %586 = vmatprep.subr.bf16.mxu0 0
    %587 = vmatpush2.bf16.msra.mxu0 0
    %588 = vmatprep.subr.bf16.mxu0 0
    %589 = vmatpush2.bf16.msra.mxu0 0
    %590 = vmatprep.subr.bf16.mxu0 0
    %591 = vmatpush2.bf16.msra.mxu0 0
    %592 = vmatprep.subr.bf16.mxu0 0
    %593 = vmatpush2.bf16.msra.mxu0 0
    %594 = vmatprep.mubr.bf16.mxu0 0
    %595 = vmatmul.mubr.bf16.gmra.mxu0 0
    %v596 = vpop.f32.mrf.mxu0
    %v597 = vadd.f32 0.0, %v596
    %v598 = vpop.f32.mrf.mxu0
    %v599 = vpop.f32.mrf.mxu0
    %v600 = vpop.f32.mrf.mxu0
    %601 = vdwg.mxu0
    %v602 = vadd.f32 %v513, %v597
    %v603 = vtanh.pop %v602
    %v605 = vcombine.high %v603, %v603
    %v607 = vunpack.c.l.s4 1966171168
    %v608 = vunpack.c.0.s8 %v607
    %v609 = vlaneseq
    %v610 = vshrl.u32 %v609, 7
    %v611 = vsub.s32 %v608, %v610
    %v612 = vrot.slane %v603, %v611
    %v614 = vunpack.c.l.s4 1966171168
    %v615 = vunpack.c.0.s8 %v614
    %v616 = vlaneseq
    %v617 = vshrl.u32 %v616, 7
    %v618 = vsub.s32 %v615, %v617
    %v619 = vrot.slane %v605, %v618
    %v620 = vcombine.high %v612, %v612
    %v621 = vcombine.high %v619, %v619
    %v623 = vunpack.c.l.s4 1966171168
    %v624 = vunpack.c.0.s8 %v623
    %v625 = vlaneseq
    %v626 = vshrl.u32 %v625, 7
    %v627 = vsub.s32 %v624, %v626
    %v628 = vrot.slane %v612, %v627
    %v630 = vunpack.c.l.s4 1966171168
    %v631 = vunpack.c.0.s8 %v630
    %v632 = vlaneseq
    %v633 = vshrl.u32 %v632, 7
    %v634 = vsub.s32 %v631, %v633
    %v635 = vrot.slane %v619, %v634
    %v637 = vunpack.c.l.s4 1966171168
    %v638 = vunpack.c.0.s8 %v637
    %v639 = vlaneseq
    %v640 = vshrl.u32 %v639, 7
    %v641 = vsub.s32 %v638, %v640
    %v642 = vrot.slane %v620, %v641
    %v644 = vunpack.c.l.s4 1966171168
    %v645 = vunpack.c.0.s8 %v644
    %v646 = vlaneseq
    %v647 = vshrl.u32 %v646, 7
    %v648 = vsub.s32 %v645, %v647
    %v649 = vrot.slane %v621, %v648
    %v650 = vcombine.high %v628, %v628
    %v651 = vcombine.high %v635, %v635
    %v652 = vcombine.high %v642, %v642
    %v653 = vcombine.high %v649, %v649
    %662 = vst [vmem:[#allocation4] sm:$0x1] %v628
    %663 = vst [vmem:[#allocation4 + $0x8] sm:$0x1] %v642
    %664 = vst [vmem:[#allocation4 + $0x10] sm:$0x1] %v650
    %665 = vst [vmem:[#allocation4 + $0x18] sm:$0x1] %v652
    %666 = vst [vmem:[#allocation4 + $0x20] sm:$0x1] %v635
    %667 = vst [vmem:[#allocation4 + $0x28] sm:$0x1] %v649
    %668 = vst [vmem:[#allocation4 + $0x30] sm:$0x1] %v651
    %669 = vst [vmem:[#allocation4 + $0x38] sm:$0x1] %v653
    %s670 = scalar_lea.vmem [#allocation3], 8
    %v671 = vld [vmem:[%s670] sm:$0xff]
    %v672 = vpack.c.bf16 %v603, %v603
    %673 = vmatprep.subr.bf16.mxu0 0
    %674 = vmatpush1.bf16.msra.mxu0 %v553
    %675 = vmatprep.subr.bf16.mxu0 0
    %676 = vmatpush1.bf16.msra.mxu0 %v552
    %677 = vmatprep.subr.bf16.mxu0 0
    %678 = vmatpush1.bf16.msra.mxu0 %v551
    %679 = vmatprep.subr.bf16.mxu0 0
    %680 = vmatpush1.bf16.msra.mxu0 %v550
    %681 = vmatprep.subr.bf16.mxu0 0
    %682 = vmatpush1.bf16.msra.mxu0 %v549
    %683 = vmatprep.subr.bf16.mxu0 0
    %684 = vmatpush1.bf16.msra.mxu0 %v548
    %685 = vmatprep.subr.bf16.mxu0 0
    %686 = vmatpush1.bf16.msra.mxu0 %v547
    %687 = vmatprep.subr.bf16.mxu0 0
    %688 = vmatpush1.bf16.msra.mxu0 %v546
    %689 = vmatprep.subr.bf16.mxu0 0
    %690 = vmatpush2.bf16.msra.mxu0 0
    %691 = vmatprep.subr.bf16.mxu0 0
    %692 = vmatpush2.bf16.msra.mxu0 0
    %693 = vmatprep.subr.bf16.mxu0 0
    %694 = vmatpush2.bf16.msra.mxu0 0
    %695 = vmatprep.subr.bf16.mxu0 0
    %696 = vmatpush2.bf16.msra.mxu0 0
    %697 = vmatprep.subr.bf16.mxu0 0
    %698 = vmatpush2.bf16.msra.mxu0 0
    %699 = vmatprep.subr.bf16.mxu0 0
    %700 = vmatpush2.bf16.msra.mxu0 0
    %701 = vmatprep.subr.bf16.mxu0 0
    %702 = vmatpush2.bf16.msra.mxu0 0
    %703 = vmatprep.subr.bf16.mxu0 0
    %704 = vmatpush2.bf16.msra.mxu0 0
    %705 = vmatprep.mubr.bf16.mxu0 0
    %706 = vmatmul.mubr.bf16.gmra.mxu0 %v672
    %v707 = vpop.f32.mrf.mxu0
    %v708 = vadd.f32 0.0, %v707
    %v709 = vpop.f32.mrf.mxu0
    %v710 = vpop.f32.mrf.mxu0
    %v711 = vpop.f32.mrf.mxu0
    %712 = vdwg.mxu0
    %v713 = vadd.f32 %v671, %v708
    %v714 = vtanh.pop %v713
    %v716 = vcombine.high %v714, %v714
    %v718 = vunpack.c.l.s4 1966171168
    %v719 = vunpack.c.0.s8 %v718
    %v720 = vlaneseq
    %v721 = vshrl.u32 %v720, 7
    %v722 = vsub.s32 %v719, %v721
    %v723 = vrot.slane %v714, %v722
    %v725 = vunpack.c.l.s4 1966171168
    %v726 = vunpack.c.0.s8 %v725
    %v727 = vlaneseq
    %v728 = vshrl.u32 %v727, 7
    %v729 = vsub.s32 %v726, %v728
    %v730 = vrot.slane %v716, %v729
    %v731 = vcombine.high %v723, %v723
    %v732 = vcombine.high %v730, %v730
    %v734 = vunpack.c.l.s4 1966171168
    %v735 = vunpack.c.0.s8 %v734
    %v736 = vlaneseq
    %v737 = vshrl.u32 %v736, 7
    %v738 = vsub.s32 %v735, %v737
    %v739 = vrot.slane %v723, %v738
    %v741 = vunpack.c.l.s4 1966171168
    %v742 = vunpack.c.0.s8 %v741
    %v743 = vlaneseq
    %v744 = vshrl.u32 %v743, 7
    %v745 = vsub.s32 %v742, %v744
    %v746 = vrot.slane %v730, %v745
    %v748 = vunpack.c.l.s4 1966171168
    %v749 = vunpack.c.0.s8 %v748
    %v750 = vlaneseq
    %v751 = vshrl.u32 %v750, 7
    %v752 = vsub.s32 %v749, %v751
    %v753 = vrot.slane %v731, %v752
    %v755 = vunpack.c.l.s4 1966171168
    %v756 = vunpack.c.0.s8 %v755
    %v757 = vlaneseq
    %v758 = vshrl.u32 %v757, 7
    %v759 = vsub.s32 %v756, %v758
    %v760 = vrot.slane %v732, %v759
    %v761 = vcombine.high %v739, %v739
    %v762 = vcombine.high %v746, %v746
    %v763 = vcombine.high %v753, %v753
    %v764 = vcombine.high %v760, %v760
    %773 = vst [vmem:[#allocation4 + $0x1] sm:$0x1] %v739
    %774 = vst [vmem:[#allocation4 + $0x9] sm:$0x1] %v753
    %775 = vst [vmem:[#allocation4 + $0x11] sm:$0x1] %v761
    %776 = vst [vmem:[#allocation4 + $0x19] sm:$0x1] %v763
    %777 = vst [vmem:[#allocation4 + $0x21] sm:$0x1] %v746
    %778 = vst [vmem:[#allocation4 + $0x29] sm:$0x1] %v760
    %779 = vst [vmem:[#allocation4 + $0x31] sm:$0x1] %v762
    %780 = vst [vmem:[#allocation4 + $0x39] sm:$0x1] %v764
    %s781 = scalar_lea.vmem [#allocation3], 16
    %v782 = vld [vmem:[%s781] sm:$0xff]
    %v783 = vpack.c.bf16 %v714, %v714
    %784 = vmatprep.subr.bf16.mxu0 0
    %785 = vmatpush1.bf16.msra.mxu0 %v553
    %786 = vmatprep.subr.bf16.mxu0 0
    %787 = vmatpush1.bf16.msra.mxu0 %v552
    %788 = vmatprep.subr.bf16.mxu0 0
    %789 = vmatpush1.bf16.msra.mxu0 %v551
    %790 = vmatprep.subr.bf16.mxu0 0
    %791 = vmatpush1.bf16.msra.mxu0 %v550
    %792 = vmatprep.subr.bf16.mxu0 0
    %793 = vmatpush1.bf16.msra.mxu0 %v549
    %794 = vmatprep.subr.bf16.mxu0 0
    %795 = vmatpush1.bf16.msra.mxu0 %v548
    %796 = vmatprep.subr.bf16.mxu0 0
    %797 = vmatpush1.bf16.msra.mxu0 %v547
    %798 = vmatprep.subr.bf16.mxu0 0
    %799 = vmatpush1.bf16.msra.mxu0 %v546
    %800 = vmatprep.subr.bf16.mxu0 0
    %801 = vmatpush2.bf16.msra.mxu0 0
    %802 = vmatprep.subr.bf16.mxu0 0
    %803 = vmatpush2.bf16.msra.mxu0 0
    %804 = vmatprep.subr.bf16.mxu0 0
    %805 = vmatpush2.bf16.msra.mxu0 0
    %806 = vmatprep.subr.bf16.mxu0 0
    %807 = vmatpush2.bf16.msra.mxu0 0
    %808 = vmatprep.subr.bf16.mxu0 0
    %809 = vmatpush2.bf16.msra.mxu0 0
    %810 = vmatprep.subr.bf16.mxu0 0
    %811 = vmatpush2.bf16.msra.mxu0 0
    %812 = vmatprep.subr.bf16.mxu0 0
    %813 = vmatpush2.bf16.msra.mxu0 0
    %814 = vmatprep.subr.bf16.mxu0 0
    %815 = vmatpush2.bf16.msra.mxu0 0
    %816 = vmatprep.mubr.bf16.mxu0 0
    %817 = vmatmul.mubr.bf16.gmra.mxu0 %v783
    %v818 = vpop.f32.mrf.mxu0
    %v819 = vadd.f32 0.0, %v818
    %v820 = vpop.f32.mrf.mxu0
    %v821 = vpop.f32.mrf.mxu0
    %v822 = vpop.f32.mrf.mxu0
    %823 = vdwg.mxu0
    %v824 = vadd.f32 %v782, %v819
    %v825 = vtanh.pop %v824
    %v827 = vcombine.high %v825, %v825
    %v829 = vunpack.c.l.s4 1966171168
    %v830 = vunpack.c.0.s8 %v829
    %v831 = vlaneseq
    %v832 = vshrl.u32 %v831, 7
    %v833 = vsub.s32 %v830, %v832
    %v834 = vrot.slane %v825, %v833
    %v836 = vunpack.c.l.s4 1966171168
    %v837 = vunpack.c.0.s8 %v836
    %v838 = vlaneseq
    %v839 = vshrl.u32 %v838, 7
    %v840 = vsub.s32 %v837, %v839
    %v841 = vrot.slane %v827, %v840
    %v842 = vcombine.high %v834, %v834
    %v843 = vcombine.high %v841, %v841
    %v845 = vunpack.c.l.s4 1966171168
    %v846 = vunpack.c.0.s8 %v845
    %v847 = vlaneseq
    %v848 = vshrl.u32 %v847, 7
    %v849 = vsub.s32 %v846, %v848
    %v850 = vrot.slane %v834, %v849
    %v852 = vunpack.c.l.s4 1966171168
    %v853 = vunpack.c.0.s8 %v852
    %v854 = vlaneseq
    %v855 = vshrl.u32 %v854, 7
    %v856 = vsub.s32 %v853, %v855
    %v857 = vrot.slane %v841, %v856
    %v859 = vunpack.c.l.s4 1966171168
    %v860 = vunpack.c.0.s8 %v859
    %v861 = vlaneseq
    %v862 = vshrl.u32 %v861, 7
    %v863 = vsub.s32 %v860, %v862
    %v864 = vrot.slane %v842, %v863
    %v866 = vunpack.c.l.s4 1966171168
    %v867 = vunpack.c.0.s8 %v866
    %v868 = vlaneseq
    %v869 = vshrl.u32 %v868, 7
    %v870 = vsub.s32 %v867, %v869
    %v871 = vrot.slane %v843, %v870
    %v872 = vcombine.high %v850, %v850
    %v873 = vcombine.high %v857, %v857
    %v874 = vcombine.high %v864, %v864
    %v875 = vcombine.high %v871, %v871
    %884 = vst [vmem:[#allocation4 + $0x2] sm:$0x1] %v850
    %885 = vst [vmem:[#allocation4 + $0xa] sm:$0x1] %v864
    %886 = vst [vmem:[#allocation4 + $0x12] sm:$0x1] %v872
    %887 = vst [vmem:[#allocation4 + $0x1a] sm:$0x1] %v874
    %888 = vst [vmem:[#allocation4 + $0x22] sm:$0x1] %v857
    %889 = vst [vmem:[#allocation4 + $0x2a] sm:$0x1] %v871
    %890 = vst [vmem:[#allocation4 + $0x32] sm:$0x1] %v873
    %891 = vst [vmem:[#allocation4 + $0x3a] sm:$0x1] %v875
    %s892 = scalar_lea.vmem [#allocation3], 24
    %v893 = vld [vmem:[%s892] sm:$0xff]
    %v894 = vpack.c.bf16 %v825, %v825
    %895 = vmatprep.subr.bf16.mxu0 0
    %896 = vmatpush1.bf16.msra.mxu0 %v553
    %897 = vmatprep.subr.bf16.mxu0 0
    %898 = vmatpush1.bf16.msra.mxu0 %v552
    %899 = vmatprep.subr.bf16.mxu0 0
    %900 = vmatpush1.bf16.msra.mxu0 %v551
    %901 = vmatprep.subr.bf16.mxu0 0
    %902 = vmatpush1.bf16.msra.mxu0 %v550
    %903 = vmatprep.subr.bf16.mxu0 0
    %904 = vmatpush1.bf16.msra.mxu0 %v549
    %905 = vmatprep.subr.bf16.mxu0 0
    %906 = vmatpush1.bf16.msra.mxu0 %v548
    %907 = vmatprep.subr.bf16.mxu0 0
    %908 = vmatpush1.bf16.msra.mxu0 %v547
    %909 = vmatprep.subr.bf16.mxu0 0
    %910 = vmatpush1.bf16.msra.mxu0 %v546
    %911 = vmatprep.subr.bf16.mxu0 0
    %912 = vmatpush2.bf16.msra.mxu0 0
    %913 = vmatprep.subr.bf16.mxu0 0
    %914 = vmatpush2.bf16.msra.mxu0 0
    %915 = vmatprep.subr.bf16.mxu0 0
    %916 = vmatpush2.bf16.msra.mxu0 0
    %917 = vmatprep.subr.bf16.mxu0 0
    %918 = vmatpush2.bf16.msra.mxu0 0
    %919 = vmatprep.subr.bf16.mxu0 0
    %920 = vmatpush2.bf16.msra.mxu0 0
    %921 = vmatprep.subr.bf16.mxu0 0
    %922 = vmatpush2.bf16.msra.mxu0 0
    %923 = vmatprep.subr.bf16.mxu0 0
    %924 = vmatpush2.bf16.msra.mxu0 0
    %925 = vmatprep.subr.bf16.mxu0 0
    %926 = vmatpush2.bf16.msra.mxu0 0
    %927 = vmatprep.mubr.bf16.mxu0 0
    %928 = vmatmul.mubr.bf16.gmra.mxu0 %v894
    %v929 = vpop.f32.mrf.mxu0
    %v930 = vadd.f32 0.0, %v929
    %v931 = vpop.f32.mrf.mxu0
    %v932 = vpop.f32.mrf.mxu0
    %v933 = vpop.f32.mrf.mxu0
    %934 = vdwg.mxu0
    %v935 = vadd.f32 %v893, %v930
    %v936 = vtanh.pop %v935
    %v938 = vcombine.high %v936, %v936
    %v940 = vunpack.c.l.s4 1966171168
    %v941 = vunpack.c.0.s8 %v940
    %v942 = vlaneseq
    %v943 = vshrl.u32 %v942, 7
    %v944 = vsub.s32 %v941, %v943
    %v945 = vrot.slane %v936, %v944
    %v947 = vunpack.c.l.s4 1966171168
    %v948 = vunpack.c.0.s8 %v947
    %v949 = vlaneseq
    %v950 = vshrl.u32 %v949, 7
    %v951 = vsub.s32 %v948, %v950
    %v952 = vrot.slane %v938, %v951
    %v953 = vcombine.high %v945, %v945
    %v954 = vcombine.high %v952, %v952
    %v956 = vunpack.c.l.s4 1966171168
    %v957 = vunpack.c.0.s8 %v956
    %v958 = vlaneseq
    %v959 = vshrl.u32 %v958, 7
    %v960 = vsub.s32 %v957, %v959
    %v961 = vrot.slane %v945, %v960
    %v963 = vunpack.c.l.s4 1966171168
    %v964 = vunpack.c.0.s8 %v963
    %v965 = vlaneseq
    %v966 = vshrl.u32 %v965, 7
    %v967 = vsub.s32 %v964, %v966
    %v968 = vrot.slane %v952, %v967
    %v970 = vunpack.c.l.s4 1966171168
    %v971 = vunpack.c.0.s8 %v970
    %v972 = vlaneseq
    %v973 = vshrl.u32 %v972, 7
    %v974 = vsub.s32 %v971, %v973
    %v975 = vrot.slane %v953, %v974
    %v977 = vunpack.c.l.s4 1966171168
    %v978 = vunpack.c.0.s8 %v977
    %v979 = vlaneseq
    %v980 = vshrl.u32 %v979, 7
    %v981 = vsub.s32 %v978, %v980
    %v982 = vrot.slane %v954, %v981
    %v983 = vcombine.high %v961, %v961
    %v984 = vcombine.high %v968, %v968
    %v985 = vcombine.high %v975, %v975
    %v986 = vcombine.high %v982, %v982
    %995 = vst [vmem:[#allocation4 + $0x3] sm:$0x1] %v961
    %996 = vst [vmem:[#allocation4 + $0xb] sm:$0x1] %v975
    %997 = vst [vmem:[#allocation4 + $0x13] sm:$0x1] %v983
    %998 = vst [vmem:[#allocation4 + $0x1b] sm:$0x1] %v985
    %999 = vst [vmem:[#allocation4 + $0x23] sm:$0x1] %v968
    %1000 = vst [vmem:[#allocation4 + $0x2b] sm:$0x1] %v982
    %1001 = vst [vmem:[#allocation4 + $0x33] sm:$0x1] %v984
    %1002 = vst [vmem:[#allocation4 + $0x3b] sm:$0x1] %v986
    %s1003 = scalar_lea.vmem [#allocation3], 32
    %v1004 = vld [vmem:[%s1003] sm:$0xff]
    %v1005 = vpack.c.bf16 %v936, %v936
    %1006 = vmatprep.subr.bf16.mxu0 0
    %1007 = vmatpush1.bf16.msra.mxu0 %v553
    %1008 = vmatprep.subr.bf16.mxu0 0
    %1009 = vmatpush1.bf16.msra.mxu0 %v552
    %1010 = vmatprep.subr.bf16.mxu0 0
    %1011 = vmatpush1.bf16.msra.mxu0 %v551
    %1012 = vmatprep.subr.bf16.mxu0 0
    %1013 = vmatpush1.bf16.msra.mxu0 %v550
    %1014 = vmatprep.subr.bf16.mxu0 0
    %1015 = vmatpush1.bf16.msra.mxu0 %v549
    %1016 = vmatprep.subr.bf16.mxu0 0
    %1017 = vmatpush1.bf16.msra.mxu0 %v548
    %1018 = vmatprep.subr.bf16.mxu0 0
    %1019 = vmatpush1.bf16.msra.mxu0 %v547
    %1020 = vmatprep.subr.bf16.mxu0 0
    %1021 = vmatpush1.bf16.msra.mxu0 %v546
    %1022 = vmatprep.subr.bf16.mxu0 0
    %1023 = vmatpush2.bf16.msra.mxu0 0
    %1024 = vmatprep.subr.bf16.mxu0 0
    %1025 = vmatpush2.bf16.msra.mxu0 0
    %1026 = vmatprep.subr.bf16.mxu0 0
    %1027 = vmatpush2.bf16.msra.mxu0 0
    %1028 = vmatprep.subr.bf16.mxu0 0
    %1029 = vmatpush2.bf16.msra.mxu0 0
    %1030 = vmatprep.subr.bf16.mxu0 0
    %1031 = vmatpush2.bf16.msra.mxu0 0
    %1032 = vmatprep.subr.bf16.mxu0 0
    %1033 = vmatpush2.bf16.msra.mxu0 0
    %1034 = vmatprep.subr.bf16.mxu0 0
    %1035 = vmatpush2.bf16.msra.mxu0 0
    %1036 = vmatprep.subr.bf16.mxu0 0
    %1037 = vmatpush2.bf16.msra.mxu0 0
    %1038 = vmatprep.mubr.bf16.mxu0 0
    %1039 = vmatmul.mubr.bf16.gmra.mxu0 %v1005
    %v1040 = vpop.f32.mrf.mxu0
    %v1041 = vadd.f32 0.0, %v1040
    %v1042 = vpop.f32.mrf.mxu0
    %v1043 = vpop.f32.mrf.mxu0
    %v1044 = vpop.f32.mrf.mxu0
    %1045 = vdwg.mxu0
    %v1046 = vadd.f32 %v1004, %v1041
    %v1047 = vtanh.pop %v1046
    %v1049 = vcombine.high %v1047, %v1047
    %v1051 = vunpack.c.l.s4 1966171168
    %v1052 = vunpack.c.0.s8 %v1051
    %v1053 = vlaneseq
    %v1054 = vshrl.u32 %v1053, 7
    %v1055 = vsub.s32 %v1052, %v1054
    %v1056 = vrot.slane %v1047, %v1055
    %v1058 = vunpack.c.l.s4 1966171168
    %v1059 = vunpack.c.0.s8 %v1058
    %v1060 = vlaneseq
    %v1061 = vshrl.u32 %v1060, 7
    %v1062 = vsub.s32 %v1059, %v1061
    %v1063 = vrot.slane %v1049, %v1062
    %v1064 = vcombine.high %v1056, %v1056
    %v1065 = vcombine.high %v1063, %v1063
    %v1067 = vunpack.c.l.s4 1966171168
    %v1068 = vunpack.c.0.s8 %v1067
    %v1069 = vlaneseq
    %v1070 = vshrl.u32 %v1069, 7
    %v1071 = vsub.s32 %v1068, %v1070
    %v1072 = vrot.slane %v1056, %v1071
    %v1074 = vunpack.c.l.s4 1966171168
    %v1075 = vunpack.c.0.s8 %v1074
    %v1076 = vlaneseq
    %v1077 = vshrl.u32 %v1076, 7
    %v1078 = vsub.s32 %v1075, %v1077
    %v1079 = vrot.slane %v1063, %v1078
    %v1081 = vunpack.c.l.s4 1966171168
    %v1082 = vunpack.c.0.s8 %v1081
    %v1083 = vlaneseq
    %v1084 = vshrl.u32 %v1083, 7
    %v1085 = vsub.s32 %v1082, %v1084
    %v1086 = vrot.slane %v1064, %v1085
    %v1088 = vunpack.c.l.s4 1966171168
    %v1089 = vunpack.c.0.s8 %v1088
    %v1090 = vlaneseq
    %v1091 = vshrl.u32 %v1090, 7
    %v1092 = vsub.s32 %v1089, %v1091
    %v1093 = vrot.slane %v1065, %v1092
    %v1094 = vcombine.high %v1072, %v1072
    %v1095 = vcombine.high %v1079, %v1079
    %v1096 = vcombine.high %v1086, %v1086
    %v1097 = vcombine.high %v1093, %v1093
    %1106 = vst [vmem:[#allocation4 + $0x4] sm:$0x1] %v1072
    %1107 = vst [vmem:[#allocation4 + $0xc] sm:$0x1] %v1086
    %1108 = vst [vmem:[#allocation4 + $0x14] sm:$0x1] %v1094
    %1109 = vst [vmem:[#allocation4 + $0x1c] sm:$0x1] %v1096
    %1110 = vst [vmem:[#allocation4 + $0x24] sm:$0x1] %v1079
    %1111 = vst [vmem:[#allocation4 + $0x2c] sm:$0x1] %v1093
    %1112 = vst [vmem:[#allocation4 + $0x34] sm:$0x1] %v1095
    %1113 = vst [vmem:[#allocation4 + $0x3c] sm:$0x1] %v1097
    %s1114 = scalar_lea.vmem [#allocation3], 40
    %v1115 = vld [vmem:[%s1114] sm:$0xff]
    %v1116 = vpack.c.bf16 %v1047, %v1047
    %1117 = vmatprep.subr.bf16.mxu0 0
    %1118 = vmatpush1.bf16.msra.mxu0 %v553
    %1119 = vmatprep.subr.bf16.mxu0 0
    %1120 = vmatpush1.bf16.msra.mxu0 %v552
    %1121 = vmatprep.subr.bf16.mxu0 0
    %1122 = vmatpush1.bf16.msra.mxu0 %v551
    %1123 = vmatprep.subr.bf16.mxu0 0
    %1124 = vmatpush1.bf16.msra.mxu0 %v550
    %1125 = vmatprep.subr.bf16.mxu0 0
    %1126 = vmatpush1.bf16.msra.mxu0 %v549
    %1127 = vmatprep.subr.bf16.mxu0 0
    %1128 = vmatpush1.bf16.msra.mxu0 %v548
    %1129 = vmatprep.subr.bf16.mxu0 0
    %1130 = vmatpush1.bf16.msra.mxu0 %v547
    %1131 = vmatprep.subr.bf16.mxu0 0
    %1132 = vmatpush1.bf16.msra.mxu0 %v546
    %1133 = vmatprep.subr.bf16.mxu0 0
    %1134 = vmatpush2.bf16.msra.mxu0 0
    %1135 = vmatprep.subr.bf16.mxu0 0
    %1136 = vmatpush2.bf16.msra.mxu0 0
    %1137 = vmatprep.subr.bf16.mxu0 0
    %1138 = vmatpush2.bf16.msra.mxu0 0
    %1139 = vmatprep.subr.bf16.mxu0 0
    %1140 = vmatpush2.bf16.msra.mxu0 0
    %1141 = vmatprep.subr.bf16.mxu0 0
    %1142 = vmatpush2.bf16.msra.mxu0 0
    %1143 = vmatprep.subr.bf16.mxu0 0
    %1144 = vmatpush2.bf16.msra.mxu0 0
    %1145 = vmatprep.subr.bf16.mxu0 0
    %1146 = vmatpush2.bf16.msra.mxu0 0
    %1147 = vmatprep.subr.bf16.mxu0 0
    %1148 = vmatpush2.bf16.msra.mxu0 0
    %1149 = vmatprep.mubr.bf16.mxu0 0
    %1150 = vmatmul.mubr.bf16.gmra.mxu0 %v1116
    %v1151 = vpop.f32.mrf.mxu0
    %v1152 = vadd.f32 0.0, %v1151
    %v1153 = vpop.f32.mrf.mxu0
    %v1154 = vpop.f32.mrf.mxu0
    %v1155 = vpop.f32.mrf.mxu0
    %1156 = vdwg.mxu0
    %v1157 = vadd.f32 %v1115, %v1152
    %v1158 = vtanh.pop %v1157
    %v1160 = vcombine.high %v1158, %v1158
    %v1162 = vunpack.c.l.s4 1966171168
    %v1163 = vunpack.c.0.s8 %v1162
    %v1164 = vlaneseq
    %v1165 = vshrl.u32 %v1164, 7
    %v1166 = vsub.s32 %v1163, %v1165
    %v1167 = vrot.slane %v1158, %v1166
    %v1169 = vunpack.c.l.s4 1966171168
    %v1170 = vunpack.c.0.s8 %v1169
    %v1171 = vlaneseq
    %v1172 = vshrl.u32 %v1171, 7
    %v1173 = vsub.s32 %v1170, %v1172
    %v1174 = vrot.slane %v1160, %v1173
    %v1175 = vcombine.high %v1167, %v1167
    %v1176 = vcombine.high %v1174, %v1174
    %v1178 = vunpack.c.l.s4 1966171168
    %v1179 = vunpack.c.0.s8 %v1178
    %v1180 = vlaneseq
    %v1181 = vshrl.u32 %v1180, 7
    %v1182 = vsub.s32 %v1179, %v1181
    %v1183 = vrot.slane %v1167, %v1182
    %v1185 = vunpack.c.l.s4 1966171168
    %v1186 = vunpack.c.0.s8 %v1185
    %v1187 = vlaneseq
    %v1188 = vshrl.u32 %v1187, 7
    %v1189 = vsub.s32 %v1186, %v1188
    %v1190 = vrot.slane %v1174, %v1189
    %v1192 = vunpack.c.l.s4 1966171168
    %v1193 = vunpack.c.0.s8 %v1192
    %v1194 = vlaneseq
    %v1195 = vshrl.u32 %v1194, 7
    %v1196 = vsub.s32 %v1193, %v1195
    %v1197 = vrot.slane %v1175, %v1196
    %v1199 = vunpack.c.l.s4 1966171168
    %v1200 = vunpack.c.0.s8 %v1199
    %v1201 = vlaneseq
    %v1202 = vshrl.u32 %v1201, 7
    %v1203 = vsub.s32 %v1200, %v1202
    %v1204 = vrot.slane %v1176, %v1203
    %v1205 = vcombine.high %v1183, %v1183
    %v1206 = vcombine.high %v1190, %v1190
    %v1207 = vcombine.high %v1197, %v1197
    %v1208 = vcombine.high %v1204, %v1204
    %1217 = vst [vmem:[#allocation4 + $0x5] sm:$0x1] %v1183
    %1218 = vst [vmem:[#allocation4 + $0xd] sm:$0x1] %v1197
    %1219 = vst [vmem:[#allocation4 + $0x15] sm:$0x1] %v1205
    %1220 = vst [vmem:[#allocation4 + $0x1d] sm:$0x1] %v1207
    %1221 = vst [vmem:[#allocation4 + $0x25] sm:$0x1] %v1190
    %1222 = vst [vmem:[#allocation4 + $0x2d] sm:$0x1] %v1204
    %1223 = vst [vmem:[#allocation4 + $0x35] sm:$0x1] %v1206
    %1224 = vst [vmem:[#allocation4 + $0x3d] sm:$0x1] %v1208
    %s1225 = scalar_lea.vmem [#allocation3], 48
    %v1226 = vld [vmem:[%s1225] sm:$0xff]
    %v1227 = vpack.c.bf16 %v1158, %v1158
    %1228 = vmatprep.subr.bf16.mxu0 0
    %1229 = vmatpush1.bf16.msra.mxu0 %v553
    %1230 = vmatprep.subr.bf16.mxu0 0
    %1231 = vmatpush1.bf16.msra.mxu0 %v552
    %1232 = vmatprep.subr.bf16.mxu0 0
    %1233 = vmatpush1.bf16.msra.mxu0 %v551
    %1234 = vmatprep.subr.bf16.mxu0 0
    %1235 = vmatpush1.bf16.msra.mxu0 %v550
    %1236 = vmatprep.subr.bf16.mxu0 0
    %1237 = vmatpush1.bf16.msra.mxu0 %v549
    %1238 = vmatprep.subr.bf16.mxu0 0
    %1239 = vmatpush1.bf16.msra.mxu0 %v548
    %1240 = vmatprep.subr.bf16.mxu0 0
    %1241 = vmatpush1.bf16.msra.mxu0 %v547
    %1242 = vmatprep.subr.bf16.mxu0 0
    %1243 = vmatpush1.bf16.msra.mxu0 %v546
    %1244 = vmatprep.subr.bf16.mxu0 0
    %1245 = vmatpush2.bf16.msra.mxu0 0
    %1246 = vmatprep.subr.bf16.mxu0 0
    %1247 = vmatpush2.bf16.msra.mxu0 0
    %1248 = vmatprep.subr.bf16.mxu0 0
    %1249 = vmatpush2.bf16.msra.mxu0 0
    %1250 = vmatprep.subr.bf16.mxu0 0
    %1251 = vmatpush2.bf16.msra.mxu0 0
    %1252 = vmatprep.subr.bf16.mxu0 0
    %1253 = vmatpush2.bf16.msra.mxu0 0
    %1254 = vmatprep.subr.bf16.mxu0 0
    %1255 = vmatpush2.bf16.msra.mxu0 0
    %1256 = vmatprep.subr.bf16.mxu0 0
    %1257 = vmatpush2.bf16.msra.mxu0 0
    %1258 = vmatprep.subr.bf16.mxu0 0
    %1259 = vmatpush2.bf16.msra.mxu0 0
    %1260 = vmatprep.mubr.bf16.mxu0 0
    %1261 = vmatmul.mubr.bf16.gmra.mxu0 %v1227
    %v1262 = vpop.f32.mrf.mxu0
    %v1263 = vadd.f32 0.0, %v1262
    %v1264 = vpop.f32.mrf.mxu0
    %v1265 = vpop.f32.mrf.mxu0
    %v1266 = vpop.f32.mrf.mxu0
    %1267 = vdwg.mxu0
    %v1268 = vadd.f32 %v1226, %v1263
    %v1269 = vtanh.pop %v1268
    %v1271 = vcombine.high %v1269, %v1269
    %v1273 = vunpack.c.l.s4 1966171168
    %v1274 = vunpack.c.0.s8 %v1273
    %v1275 = vlaneseq
    %v1276 = vshrl.u32 %v1275, 7
    %v1277 = vsub.s32 %v1274, %v1276
    %v1278 = vrot.slane %v1269, %v1277
    %v1280 = vunpack.c.l.s4 1966171168
    %v1281 = vunpack.c.0.s8 %v1280
    %v1282 = vlaneseq
    %v1283 = vshrl.u32 %v1282, 7
    %v1284 = vsub.s32 %v1281, %v1283
    %v1285 = vrot.slane %v1271, %v1284
    %v1286 = vcombine.high %v1278, %v1278
    %v1287 = vcombine.high %v1285, %v1285
    %v1289 = vunpack.c.l.s4 1966171168
    %v1290 = vunpack.c.0.s8 %v1289
    %v1291 = vlaneseq
    %v1292 = vshrl.u32 %v1291, 7
    %v1293 = vsub.s32 %v1290, %v1292
    %v1294 = vrot.slane %v1278, %v1293
    %v1296 = vunpack.c.l.s4 1966171168
    %v1297 = vunpack.c.0.s8 %v1296
    %v1298 = vlaneseq
    %v1299 = vshrl.u32 %v1298, 7
    %v1300 = vsub.s32 %v1297, %v1299
    %v1301 = vrot.slane %v1285, %v1300
    %v1303 = vunpack.c.l.s4 1966171168
    %v1304 = vunpack.c.0.s8 %v1303
    %v1305 = vlaneseq
    %v1306 = vshrl.u32 %v1305, 7
    %v1307 = vsub.s32 %v1304, %v1306
    %v1308 = vrot.slane %v1286, %v1307
    %v1310 = vunpack.c.l.s4 1966171168
    %v1311 = vunpack.c.0.s8 %v1310
    %v1312 = vlaneseq
    %v1313 = vshrl.u32 %v1312, 7
    %v1314 = vsub.s32 %v1311, %v1313
    %v1315 = vrot.slane %v1287, %v1314
    %v1316 = vcombine.high %v1294, %v1294
    %v1317 = vcombine.high %v1301, %v1301
    %v1318 = vcombine.high %v1308, %v1308
    %v1319 = vcombine.high %v1315, %v1315
    %1328 = vst [vmem:[#allocation4 + $0x6] sm:$0x1] %v1294
    %1329 = vst [vmem:[#allocation4 + $0xe] sm:$0x1] %v1308
    %1330 = vst [vmem:[#allocation4 + $0x16] sm:$0x1] %v1316
    %1331 = vst [vmem:[#allocation4 + $0x1e] sm:$0x1] %v1318
    %1332 = vst [vmem:[#allocation4 + $0x26] sm:$0x1] %v1301
    %1333 = vst [vmem:[#allocation4 + $0x2e] sm:$0x1] %v1315
    %1334 = vst [vmem:[#allocation4 + $0x36] sm:$0x1] %v1317
    %1335 = vst [vmem:[#allocation4 + $0x3e] sm:$0x1] %v1319
    %s1336 = scalar_lea.vmem [#allocation3], 56
    %v1337 = vld [vmem:[%s1336] sm:$0xff]
    %v1338 = vpack.c.bf16 %v1269, %v1269
    %1339 = vmatprep.subr.bf16.mxu0 0
    %1340 = vmatpush1.bf16.msra.mxu0 %v553
    %1341 = vmatprep.subr.bf16.mxu0 0
    %1342 = vmatpush1.bf16.msra.mxu0 %v552
    %1343 = vmatprep.subr.bf16.mxu0 0
    %1344 = vmatpush1.bf16.msra.mxu0 %v551
    %1345 = vmatprep.subr.bf16.mxu0 0
    %1346 = vmatpush1.bf16.msra.mxu0 %v550
    %1347 = vmatprep.subr.bf16.mxu0 0
    %1348 = vmatpush1.bf16.msra.mxu0 %v549
    %1349 = vmatprep.subr.bf16.mxu0 0
    %1350 = vmatpush1.bf16.msra.mxu0 %v548
    %1351 = vmatprep.subr.bf16.mxu0 0
    %1352 = vmatpush1.bf16.msra.mxu0 %v547
    %1353 = vmatprep.subr.bf16.mxu0 0
    %1354 = vmatpush1.bf16.msra.mxu0 %v546
    %1355 = vmatprep.subr.bf16.mxu0 0
    %1356 = vmatpush2.bf16.msra.mxu0 0
    %1357 = vmatprep.subr.bf16.mxu0 0
    %1358 = vmatpush2.bf16.msra.mxu0 0
    %1359 = vmatprep.subr.bf16.mxu0 0
    %1360 = vmatpush2.bf16.msra.mxu0 0
    %1361 = vmatprep.subr.bf16.mxu0 0
    %1362 = vmatpush2.bf16.msra.mxu0 0
    %1363 = vmatprep.subr.bf16.mxu0 0
    %1364 = vmatpush2.bf16.msra.mxu0 0
    %1365 = vmatprep.subr.bf16.mxu0 0
    %1366 = vmatpush2.bf16.msra.mxu0 0
    %1367 = vmatprep.subr.bf16.mxu0 0
    %1368 = vmatpush2.bf16.msra.mxu0 0
    %1369 = vmatprep.subr.bf16.mxu0 0
    %1370 = vmatpush2.bf16.msra.mxu0 0
    %1371 = vmatprep.mubr.bf16.mxu0 0
    %1372 = vmatmul.mubr.bf16.gmra.mxu0 %v1338
    %v1373 = vpop.f32.mrf.mxu0
    %v1374 = vadd.f32 0.0, %v1373
    %v1375 = vpop.f32.mrf.mxu0
    %v1376 = vpop.f32.mrf.mxu0
    %v1377 = vpop.f32.mrf.mxu0
    %1378 = vdwg.mxu0
    %v1379 = vadd.f32 %v1337, %v1374
    %v1380 = vtanh.pop %v1379
    %v1382 = vcombine.high %v1380, %v1380
    %v1384 = vunpack.c.l.s4 1966171168
    %v1385 = vunpack.c.0.s8 %v1384
    %v1386 = vlaneseq
    %v1387 = vshrl.u32 %v1386, 7
    %v1388 = vsub.s32 %v1385, %v1387
    %v1389 = vrot.slane %v1380, %v1388
    %v1391 = vunpack.c.l.s4 1966171168
    %v1392 = vunpack.c.0.s8 %v1391
    %v1393 = vlaneseq
    %v1394 = vshrl.u32 %v1393, 7
    %v1395 = vsub.s32 %v1392, %v1394
    %v1396 = vrot.slane %v1382, %v1395
    %v1397 = vcombine.high %v1389, %v1389
    %v1398 = vcombine.high %v1396, %v1396
    %v1400 = vunpack.c.l.s4 1966171168
    %v1401 = vunpack.c.0.s8 %v1400
    %v1402 = vlaneseq
    %v1403 = vshrl.u32 %v1402, 7
    %v1404 = vsub.s32 %v1401, %v1403
    %v1405 = vrot.slane %v1389, %v1404
    %v1407 = vunpack.c.l.s4 1966171168
    %v1408 = vunpack.c.0.s8 %v1407
    %v1409 = vlaneseq
    %v1410 = vshrl.u32 %v1409, 7
    %v1411 = vsub.s32 %v1408, %v1410
    %v1412 = vrot.slane %v1396, %v1411
    %v1414 = vunpack.c.l.s4 1966171168
    %v1415 = vunpack.c.0.s8 %v1414
    %v1416 = vlaneseq
    %v1417 = vshrl.u32 %v1416, 7
    %v1418 = vsub.s32 %v1415, %v1417
    %v1419 = vrot.slane %v1397, %v1418
    %v1421 = vunpack.c.l.s4 1966171168
    %v1422 = vunpack.c.0.s8 %v1421
    %v1423 = vlaneseq
    %v1424 = vshrl.u32 %v1423, 7
    %v1425 = vsub.s32 %v1422, %v1424
    %v1426 = vrot.slane %v1398, %v1425
    %v1427 = vcombine.high %v1405, %v1405
    %v1428 = vcombine.high %v1412, %v1412
    %v1429 = vcombine.high %v1419, %v1419
    %v1430 = vcombine.high %v1426, %v1426
    %1439 = vst [vmem:[#allocation4 + $0x7] sm:$0x1] %v1405
    %1440 = vst [vmem:[#allocation4 + $0xf] sm:$0x1] %v1419
    %1441 = vst [vmem:[#allocation4 + $0x17] sm:$0x1] %v1427
    %1442 = vst [vmem:[#allocation4 + $0x1f] sm:$0x1] %v1429
    %1443 = vst [vmem:[#allocation4 + $0x27] sm:$0x1] %v1412
    %1444 = vst [vmem:[#allocation4 + $0x2f] sm:$0x1] %v1426
    %1445 = vst [vmem:[#allocation4 + $0x37] sm:$0x1] %v1428
    %1446 = vst [vmem:[#allocation4 + $0x3f] sm:$0x1] %v1430
    %v1447 = vld [vmem:[#allocation4] sm:$0xff]
    %v1448 = vld [vmem:[#allocation4 + $0x8] sm:$0xff]
    %v1449 = vld [vmem:[#allocation4 + $0x10] sm:$0xff]
    %v1450 = vld [vmem:[#allocation4 + $0x18] sm:$0xff]
    %v1451 = vld [vmem:[#allocation4 + $0x20] sm:$0xff]
    %v1452 = vld [vmem:[#allocation4 + $0x28] sm:$0xff]
    %v1453 = vld [vmem:[#allocation4 + $0x30] sm:$0xff]
    %v1454 = vld [vmem:[#allocation4 + $0x38] sm:$0xff]
    %v1455 = vpack.c.bf16 %v1448, %v1447
    %v1456 = vpack.c.bf16 %v1450, %v1449
    %v1457 = vpack.c.bf16 %v1452, %v1451
    %v1458 = vpack.c.bf16 %v1454, %v1453
    %v1459 = vld [vmem:[#allocation13] sm:$0xf]
    %v1460 = vld [vmem:[#allocation13 + $0x4] sm:$0xf]
    %v1461 = vld [vmem:[#allocation13 + $0x8] sm:$0xf]
    %v1462 = vld [vmem:[#allocation13 + $0xc] sm:$0xf]
    %v1463 = vld [vmem:[#allocation13 + $0x10] sm:$0xf]
    %v1464 = vld [vmem:[#allocation13 + $0x14] sm:$0xf]
    %v1465 = vld [vmem:[#allocation13 + $0x18] sm:$0xf]
    %v1466 = vld [vmem:[#allocation13 + $0x1c] sm:$0xf]
    %v1467 = vld [vmem:[#allocation13 + $0x20] sm:$0xf]
    %v1468 = vld [vmem:[#allocation13 + $0x24] sm:$0xf]
    %v1469 = vld [vmem:[#allocation13 + $0x28] sm:$0xf]
    %v1470 = vld [vmem:[#allocation13 + $0x2c] sm:$0xf]
    %v1471 = vld [vmem:[#allocation13 + $0x30] sm:$0xf]
    %v1472 = vld [vmem:[#allocation13 + $0x34] sm:$0xf]
    %v1473 = vld [vmem:[#allocation13 + $0x38] sm:$0xf]
    %v1474 = vld [vmem:[#allocation13 + $0x3c] sm:$0xf]
    %v1475 = vld [vmem:[%s6] sm:$0x1]
    %v1477 = vlaneseq
    %v1478 = vshrl.u32 %v1477, 7
    %v1479 = vsub.s32 0, %v1478
    %v1480 = vrot.slane %v1475, %v1479
    %v1498 = vunpack.c.l.b16 %v1459
    %v1499 = vunpack.c.l.b16 %v1460
    %v1500 = vunpack.c.l.b16 %v1461
    %v1501 = vunpack.c.l.b16 %v1462
    %v1502 = vunpack.c.l.b16 %v1463
    %v1503 = vunpack.c.l.b16 %v1464
    %v1504 = vunpack.c.l.b16 %v1465
    %v1505 = vunpack.c.l.b16 %v1466
    %v1506 = vunpack.c.l.b16 %v1467
    %v1507 = vunpack.c.l.b16 %v1468
    %v1508 = vunpack.c.l.b16 %v1469
    %v1509 = vunpack.c.l.b16 %v1470
    %v1510 = vunpack.c.l.b16 %v1471
    %v1511 = vunpack.c.l.b16 %v1472
    %v1512 = vunpack.c.l.b16 %v1473
    %v1513 = vunpack.c.l.b16 %v1474
    %v1514 = vpack.c.b16 %v1499, %v1498
    %v1515 = vpack.c.b16 %v1501, %v1500
    %v1516 = vpack.c.b16 %v1503, %v1502
    %v1517 = vpack.c.b16 %v1505, %v1504
    %v1518 = vpack.c.b16 %v1507, %v1506
    %v1519 = vpack.c.b16 %v1509, %v1508
    %v1520 = vpack.c.b16 %v1511, %v1510
    %v1521 = vpack.c.b16 %v1513, %v1512
    %1530 = vmatprep.subr.bf16.mxu0 0
    %1531 = vmatpush1.bf16.msra.mxu0 %v1521
    %1532 = vmatprep.subr.bf16.mxu0 0
    %1533 = vmatpush1.bf16.msra.mxu0 %v1520
    %1534 = vmatprep.subr.bf16.mxu0 0
    %1535 = vmatpush1.bf16.msra.mxu0 %v1519
    %1536 = vmatprep.subr.bf16.mxu0 0
    %1537 = vmatpush1.bf16.msra.mxu0 %v1518
    %1538 = vmatprep.subr.bf16.mxu0 0
    %1539 = vmatpush1.bf16.msra.mxu0 %v1517
    %1540 = vmatprep.subr.bf16.mxu0 0
    %1541 = vmatpush1.bf16.msra.mxu0 %v1516
    %1542 = vmatprep.subr.bf16.mxu0 0
    %1543 = vmatpush1.bf16.msra.mxu0 %v1515
    %1544 = vmatprep.subr.bf16.mxu0 0
    %1545 = vmatpush1.bf16.msra.mxu0 %v1514
    %1546 = vmatprep.subr.bf16.mxu0 0
    %1547 = vmatpush2.bf16.msra.mxu0 0
    %1548 = vmatprep.subr.bf16.mxu0 0
    %1549 = vmatpush2.bf16.msra.mxu0 0
    %1550 = vmatprep.subr.bf16.mxu0 0
    %1551 = vmatpush2.bf16.msra.mxu0 0
    %1552 = vmatprep.subr.bf16.mxu0 0
    %1553 = vmatpush2.bf16.msra.mxu0 0
    %1554 = vmatprep.subr.bf16.mxu0 0
    %1555 = vmatpush2.bf16.msra.mxu0 0
    %1556 = vmatprep.subr.bf16.mxu0 0
    %1557 = vmatpush2.bf16.msra.mxu0 0
    %1558 = vmatprep.subr.bf16.mxu0 0
    %1559 = vmatpush2.bf16.msra.mxu0 0
    %1560 = vmatprep.subr.bf16.mxu0 0
    %1561 = vmatpush2.bf16.msra.mxu0 0
    %1562 = vmatprep.mubr.bf16.mxu0 0
    %1563 = vmatmul.mubr.bf16.gmra.mxu0 %v1455
    %v1564 = vpop.f32.mrf.mxu0
    %v1565 = vadd.f32 %v1480, %v1564
    %v1566 = vpop.f32.mrf.mxu0
    %v1567 = vpop.f32.mrf.mxu0
    %v1568 = vadd.f32 %v1480, %v1567
    %v1569 = vpop.f32.mrf.mxu0
    %1570 = vmatprep.mubr.bf16.mxu0 0
    %1571 = vmatmul.mubr.bf16.gmra.mxu0 %v1456
    %v1572 = vpop.f32.mrf.mxu0
    %v1573 = vadd.f32 %v1480, %v1572
    %v1574 = vpop.f32.mrf.mxu0
    %v1575 = vpop.f32.mrf.mxu0
    %v1576 = vadd.f32 %v1480, %v1575
    %v1577 = vpop.f32.mrf.mxu0
    %1578 = vmatprep.mubr.bf16.mxu0 0
    %1579 = vmatmul.mubr.bf16.gmra.mxu0 %v1457
    %v1580 = vpop.f32.mrf.mxu0
    %v1581 = vadd.f32 %v1480, %v1580
    %v1582 = vpop.f32.mrf.mxu0
    %v1583 = vpop.f32.mrf.mxu0
    %v1584 = vadd.f32 %v1480, %v1583
    %v1585 = vpop.f32.mrf.mxu0
    %1586 = vmatprep.mubr.bf16.mxu0 0
    %1587 = vmatmul.mubr.bf16.gmra.mxu0 %v1458
    %v1588 = vpop.f32.mrf.mxu0
    %v1589 = vadd.f32 %v1480, %v1588
    %v1590 = vpop.f32.mrf.mxu0
    %v1591 = vpop.f32.mrf.mxu0
    %v1592 = vadd.f32 %v1480, %v1591
    %v1593 = vpop.f32.mrf.mxu0
    %1594 = vdwg.mxu0
    %1595 = vst [vmem:[#allocation15] sm:$0xff] %v1565
    %1596 = vst [vmem:[#allocation15 + $0x8] sm:$0xff] %v1568
    %1597 = vst [vmem:[#allocation15 + $0x10] sm:$0xff] %v1573
    %1598 = vst [vmem:[#allocation15 + $0x18] sm:$0xff] %v1576
    %1599 = vst [vmem:[#allocation15 + $0x20] sm:$0xff] %v1581
    %1600 = vst [vmem:[#allocation15 + $0x28] sm:$0xff] %v1584
    %1601 = vst [vmem:[#allocation15 + $0x30] sm:$0xff] %v1589
    %1602 = vst [vmem:[#allocation15 + $0x38] sm:$0xff] %v1592
    // Predicated region
    $region42: #{tpu_custom_call.1} parent=1 // pred_check
      _
    $region43: #{tpu_custom_call.1} parent=1 // pred_check_branch
      %1604 = sbr.rel (0) target = $region45
    $region44: #{tpu_custom_call.1} parent=1 // pred_region
      %s1606 = ssub.s32 1024, 1024
      %1607 = vsyncadd [#allocation9], %s1606
      %s1608 = sshll.u32 [#allocation15], 4
      %s1609 = int_to_ptr.vmem [resolvable:$true] %s1608
      %1614 = dma.vmem_to_hbm [thread:$0]  %s1609, 1024, %s7, [#allocation9], 128, 128, 8
    $region45: #{tpu_custom_call.1} parent=1 // pred_fallthru
      _
    // Predicated region
    $region46: #{tpu_custom_call.1} parent=1 // pred_check
      _
    $region47: #{tpu_custom_call.1} parent=1 // pred_check_branch
      %1616 = sbr.rel (0) target = $region49
    $region48: #{tpu_custom_call.1} parent=1 // pred_region
      %1617 = dma.done [#allocation9], 1024
    $region49: #{tpu_custom_call.1} parent=1 // pred_fallthru
      _
    %1618 = vsyncpa [#allocation8], 1
    %1619 = vsyncpa [#allocation11], 1
    %1620 = vsyncpa [#allocation14], 1
    %1621 = vsyncpa [#allocation9], 1

</llo_original>
